<compile_context>
chip_gen: v7x
topology: tpu7x:2x2x1
jax: 0.10.0
libtpu: 0.0.40
codegen_flags: <defaults>
</compile_context>

<pallas_src>
import functools

import jax
import jax.numpy as jnp
from jax.experimental import pallas as pl
from jax.experimental.pallas import tpu as pltpu


def _round_up(x, m):
    return (x + m - 1) // m * m


# ---------------- pass 1: row-tiled conv (KH fat MXU matmuls) + BN Welford partials ------------

def _conv_stats_kernel(x_ref, w_ref, y_ref, stats_ref, acc_ref, *, KH, KW, OH, OW, TH, stride):
    """Compute a (TH, OW) row tile of the conv output for one image + BN partial statistics.

    x_ref:     (1, HPad, WP, Cin)  bf16  full padded image (VMEM-resident across row tiles)
    w_ref:     (KH, KW*Cin, Cpad)  bf16  weights with the KW taps folded into the K dim
    y_ref:     (1, TH, OW, Cpad)   bf16  conv output tile (no bias; cancels through BN)
    stats_ref: (1, 1, 2, Cpad)     f32   row 0: sum over valid rows, row 1: M2 about tile mean
    acc_ref:   (TH*OW, Cpad)       f32   VMEM accumulator scratch (bounds vreg pressure)
    """
    cin = x_ref.shape[-1]
    cpad = y_ref.shape[-1]
    t = pl.program_id(1)
    row0 = t * TH                                        # first output row of this tile
    r0 = pl.multiple_of(row0 * stride, TH * stride)      # first padded-input row of the slab
    hs = (TH - 1) * stride + KH                          # slab height incl. (KH-1)-row halo

    # Fold the KW width taps into the contraction dim:
    #   wide[r, ow, kw*Cin + ci] = x[r0 + r, ow*stride + kw, ci]
    def width_tap(kw):
        if stride == 1:
            return x_ref[0, pl.ds(r0, hs), kw:kw + OW, :]
        return x_ref[0, pl.ds(r0, hs), pl.ds(kw, OW, stride=stride), :]

    wide = jnp.concatenate([width_tap(kw) for kw in range(KW)], axis=-1)   # (hs, OW, KW*Cin) bf16

    # KH accumulated MXU matmuls: M = TH*OW rows, K = KW*Cin, N = Cpad, f32 accumulation.
    for kh in range(KH):
        if stride == 1:
            xs = wide[kh:kh + TH]                                           # (TH, OW, KW*Cin)
        else:
            xs = jax.lax.slice_in_dim(wide, kh, kh + (TH - 1) * stride + 1, stride, axis=0)
        contrib = jnp.dot(xs.reshape(TH * OW, KW * cin), w_ref[kh],
                          preferred_element_type=jnp.float32)               # (TH*OW, Cpad) f32
        if kh == 0:
            acc_ref[...] = contrib
        else:
            acc_ref[...] += contrib

    acc = acc_ref[...]
    y_ref[0] = acc.reshape(TH, OW, cpad).astype(y_ref.dtype)                # bf16 writeback

    # Per-tile Welford partials (sum + M2 about the tile mean); mask rows >= OH when the last
    # tile is ragged.  Combined across tiles/images in the wrapper (Chan's parallel algorithm).
    if OH % TH != 0:
        r = jax.lax.broadcasted_iota(jnp.int32, (TH * OW, 1), 0) // OW
        valid = (row0 + r) < OH
        cnt = (jnp.minimum(TH, OH - row0) * OW).astype(jnp.float32)
        acc_m = jnp.where(valid, acc, 0.0)
        s1 = jnp.sum(acc_m, axis=0, keepdims=True)                          # (1, Cpad)
        mean_t = s1 * (1.0 / cnt)
        dev = jnp.where(valid, acc - mean_t, 0.0)
    else:
        s1 = jnp.sum(acc, axis=0, keepdims=True)
        mean_t = s1 * (1.0 / float(TH * OW))
        dev = acc - mean_t
    stats_ref[0, 0, 0:1, :] = s1
    stats_ref[0, 0, 1:2, :] = jnp.sum(dev * dev, axis=0, keepdims=True)


# ---------------- pass 2: fused BN affine + ReLU over lane-dense (TM, Cpad) row tiles ----------

def _bn_relu_kernel(y_ref, scale_ref, shift_ref, o_ref):
    y = y_ref[...].astype(jnp.float32)
    o_ref[...] = jnp.maximum(y * scale_ref[...] + shift_ref[...], 0.0)


# ------------------------------------------ wrapper --------------------------------------------

def _unet_conv_block_impl(x_nchw, conv_w, conv_b, bn_gamma, bn_beta, *, stride, padding, eps):
    del conv_b  # training-mode BN subtracts the batch mean -> the conv bias cancels exactly
    N, Cin, H, W = x_nchw.shape
    Cout, _, KH, KW = conv_w.shape
    OH = (H + 2 * padding - KH) // stride + 1
    OW = (W + 2 * padding - KW) // stride + 1
    HP, WP = H + 2 * padding, W + 2 * padding
    Cpad = _round_up(Cout, 128)

    # Row tile: target ~256 output rows per MXU pass (M dim), clamped to the image height.
    TH = max(1, min(OH, max(1, 256 // OW)))
    nTH = (OH + TH - 1) // TH
    OHp = nTH * TH
    HP_need = (OHp - 1) * stride + KH            # padded-input rows the last tile touches
    extra_rows = max(0, HP_need - HP)
    HPad = HP + extra_rows

    # NCHW -> padded NHWC (channels-last inside the kernel), bf16 for the MXU.
    x = jnp.transpose(x_nchw, (0, 2, 3, 1))
    x = jnp.pad(x, ((0, 0), (padding, padding + extra_rows), (padding, padding), (0, 0)))
    x = x.astype(jnp.bfloat16)

    # Weights: (Cout, Cin, KH, KW) -> (KH, KW*Cin, Cpad): KW folded into the contraction dim,
    # Cout zero-padded to a lane-dense multiple of 128, bf16.
    w = jnp.transpose(conv_w, (2, 3, 1, 0)).reshape(KH, KW * Cin, Cout)
    w = jnp.pad(w, ((0, 0), (0, 0), (0, Cpad - Cout))).astype(jnp.bfloat16)

    conv_flops = 2 * N * OHp * OW * KH * KW * Cin * Cpad
    conv_bytes = (x.size * 2 + w.size * 2 + N * OHp * OW * Cpad * 2 + N * nTH * 2 * Cpad * 4)
    y, stats = pl.pallas_call(
        functools.partial(_conv_stats_kernel, KH=KH, KW=KW, OH=OH, OW=OW, TH=TH, stride=stride),
        grid=(N, nTH),
        in_specs=[
            # full padded image per n; block index ignores t -> stays resident across row tiles
            pl.BlockSpec((1, HPad, WP, Cin), lambda n, t: (n, 0, 0, 0)),
            pl.BlockSpec((KH, KW * Cin, Cpad), lambda n, t: (0, 0, 0)),
        ],
        out_specs=(
            pl.BlockSpec((1, TH, OW, Cpad), lambda n, t: (n, t, 0, 0)),
            pl.BlockSpec((1, 1, 2, Cpad), lambda n, t: (n, t, 0, 0)),
        ),
        out_shape=(
            jax.ShapeDtypeStruct((N, OHp, OW, Cpad), jnp.bfloat16),   # bf16 intermediate
            jax.ShapeDtypeStruct((N, nTH, 2, Cpad), jnp.float32),
        ),
        scratch_shapes=[pltpu.VMEM((TH * OW, Cpad), jnp.float32)],
        compiler_params=pltpu.CompilerParams(
            dimension_semantics=("parallel", "parallel")),
        cost_estimate=pl.CostEstimate(flops=conv_flops, transcendentals=0,
                                      bytes_accessed=conv_bytes),
    )(x, w)

    # Combine per-tile Welford partials (Chan's parallel algorithm) -> batch mean / biased var,
    # then fold gamma/beta into a fused scale/shift.  All of this is tiny (N*nTH x Cpad).
    counts = jnp.array([min(TH, OH - t * TH) * OW for t in range(nTH)], dtype=jnp.float32)
    cnt = counts.reshape(1, nTH, 1)
    total = float(N * OH * OW)
    sums = stats[:, :, 0, :]                                  # (N, nTH, Cpad)
    m2s = stats[:, :, 1, :]
    mean = jnp.sum(sums, axis=(0, 1)) / total                 # (Cpad,)
    mean_t = sums / cnt
    m2 = jnp.sum(m2s, axis=(0, 1)) + jnp.sum(cnt * jnp.square(mean_t - mean), axis=(0, 1))
    var = jnp.maximum(m2 / total, 0.0)                        # biased var (PyTorch training BN)

    gamma = jnp.pad(bn_gamma.astype(jnp.float32), (0, Cpad - Cout))
    beta = jnp.pad(bn_beta.astype(jnp.float32), (0, Cpad - Cout))
    scale = (gamma * jax.lax.rsqrt(var + eps)).reshape(1, Cpad)
    shift = (beta - mean * scale[0]).reshape(1, Cpad)

    # Pass 2 over M = N*OHp*OW rows, lane-dense Cpad columns, large row tiles (HBM-bound).
    M = N * OHp * OW
    TM = min(1024, _round_up(M, 16))
    Mp = _round_up(M, TM)
    y_flat = y.reshape(M, Cpad)
    if Mp != M:
        y_flat = jnp.pad(y_flat, ((0, Mp - M), (0, 0)))
    out_flat = pl.pallas_call(
        _bn_relu_kernel,
        grid=(Mp // TM,),
        in_specs=[pl.BlockSpec((TM, Cpad), lambda i: (i, 0)),
                  pl.BlockSpec((1, Cpad), lambda i: (0, 0)),
                  pl.BlockSpec((1, Cpad), lambda i: (0, 0))],
        out_specs=pl.BlockSpec((TM, Cpad), lambda i: (i, 0)),
        out_shape=jax.ShapeDtypeStruct((Mp, Cpad), jnp.float32),
        compiler_params=pltpu.CompilerParams(dimension_semantics=("parallel",)),
        cost_estimate=pl.CostEstimate(flops=3 * Mp * Cpad, transcendentals=0,
                                      bytes_accessed=Mp * Cpad * (2 + 4) + 2 * Cpad * 4),
    )(y_flat, scale, shift)

    out = out_flat[:M].reshape(N, OHp, OW, Cpad)[:, :OH, :, :Cout]
    return jnp.transpose(out, (0, 3, 1, 2))                   # back to NCHW (PyTorch-facing)


unet_conv_block = jax.jit(_unet_conv_block_impl, static_argnames=("stride", "padding", "eps"))


def _reference(x, conv_w, conv_b, bn_gamma, bn_beta, *, stride, padding, eps=1e-5):
    # Same math as the PyTorch module (training-mode BN), applied to the same bf16-rounded
    # inputs the kernel consumes.  The bias is kept here; it must cancel through BN.
    xc = x.astype(jnp.bfloat16).astype(jnp.float32)
    wc = conv_w.astype(jnp.bfloat16).astype(jnp.float32)
    y = jax.lax.conv_general_dilated(
        xc, wc, window_strides=(stride, stride),
        padding=[(padding, padding), (padding, padding)],
        dimension_numbers=("NCHW", "OIHW", "NCHW"))
    y = y + conv_b.reshape(1, -1, 1, 1)
    mean = jnp.mean(y, axis=(0, 2, 3), keepdims=True)
    var = jnp.mean((y - mean) ** 2, axis=(0, 2, 3), keepdims=True)
    y = (y - mean) * jax.lax.rsqrt(var + eps)
    y = y * bn_gamma.reshape(1, -1, 1, 1) + bn_beta.reshape(1, -1, 1, 1)
    return jnp.maximum(y, 0.0)


if __name__ == "__main__":
    def _run_case(key, N, Cin, H, W, Cout, K, stride, padding, tag):
        kx, kw_, kb, kg, kbe = jax.random.split(key, 5)
        x = jax.random.normal(kx, (N, Cin, H, W), dtype=jnp.float32)
        conv_w = 0.1 * jax.random.normal(kw_, (Cout, Cin, K, K), dtype=jnp.float32)
        conv_b = 0.1 * jax.random.normal(kb, (Cout,), dtype=jnp.float32)
        gamma = 1.0 + 0.1 * jax.random.normal(kg, (Cout,), dtype=jnp.float32)
        beta = 0.1 * jax.random.normal(kbe, (Cout,), dtype=jnp.float32)

        out = unet_conv_block(x, conv_w, conv_b, gamma, beta,
                              stride=stride, padding=padding, eps=1e-5)
        out = jax.block_until_ready(out)

        ref = _reference(x, conv_w, conv_b, gamma, beta, stride=stride, padding=padding)
        OH = (H + 2 * padding - K) // stride + 1
        OW = (W + 2 * padding - K) // stride + 1
        assert out.shape == (N, Cout, OH, OW), f"bad shape ({tag})"
        # Tolerance dominated by the bf16 conv intermediate (|y| * 2^-9 amplified by gamma/std);
        # any structural bug (wrong tap / swapped scale-shift) produces O(1) errors.
        assert jnp.allclose(out, ref, atol=2e-2, rtol=2e-2), f"mismatch vs reference ({tag})"

    key = jax.random.PRNGKey(0)
    k1, k2 = jax.random.split(key)
    # primary demo shape (matches the module spec example sizes)
    _run_case(k1, N=2, Cin=4, H=16, W=16, Cout=8, K=3, stride=1, padding=1, tag="base")
    # taller image: exercises multi-row-tile pass 1, the ragged last tile (row masking) and the
    # Chan parallel combine of the per-tile Welford statistics.
    _run_case(k2, N=1, Cin=3, H=40, W=16, Cout=16, K=3, stride=1, padding=1, tag="tiled")

    print("KERNEL_OK")
</pallas_src>

<mosaic_0001>
module attributes {stable_mosaic.version = 11 : i64} {
  func.func @_conv_stats_kernel(%arg0: i32, %arg1: i32, %arg2: memref<1x18x18x4xbf16, #tpu.memory_space<vmem>>, %arg3: memref<3x12x128xbf16, #tpu.memory_space<vmem>>, %arg4: memref<1x16x16x128xbf16, #tpu.memory_space<vmem>>, %arg5: memref<1x1x2x128xf32, #tpu.memory_space<vmem>>, %arg6: memref<256x128xf32, #tpu.memory_space<vmem>>) attributes {dimension_semantics = [#tpu.dimension_semantics<parallel>, #tpu.dimension_semantics<parallel>], iteration_bounds = array<i64: 2, 1>, scalar_prefetch = 0 : i64, scratch_operands = 1 : i64, tpu.core_type = #tpu.core_type<tc>, window_params = [{transform_indices = @transform_0, window_bounds = array<i64: 1, 18, 18, 4>}, {pipeline_mode = #tpu.pipeline_mode<synchronous>, transform_indices = @transform_1, window_bounds = array<i64: 3, 12, 128>}, {transform_indices = @transform_2, window_bounds = array<i64: 1, 16, 16, 128>}, {transform_indices = @transform_3, window_bounds = array<i64: 1, 1, 2, 128>}]} {
    %c16_i32 = arith.constant 16 : i32
    %0 = arith.muli %arg1, %c16_i32 : i32
    %c1_i32 = arith.constant 1 : i32
    %1 = arith.muli %0, %c1_i32 : i32
    %2 = tpu.assume_multiple %1, 16 : i32
    %c0 = arith.constant 0 : index
    %3 = arith.index_cast %2 : i32 to index
    %c0_0 = arith.constant 0 : index
    %c0_1 = arith.constant 0 : index
    %4 = vector.load %arg2[%c0, %3, %c0_0, %c0_1] : memref<1x18x18x4xbf16, #tpu.memory_space<vmem>>, vector<1x18x16x4xbf16>
    %5 = vector.shape_cast %4 : vector<1x18x16x4xbf16> to vector<18x16x4xbf16>
    %c0_2 = arith.constant 0 : index
    %6 = arith.index_cast %2 : i32 to index
    %c1 = arith.constant 1 : index
    %c0_3 = arith.constant 0 : index
    %7 = vector.load %arg2[%c0_2, %6, %c1, %c0_3] : memref<1x18x18x4xbf16, #tpu.memory_space<vmem>>, vector<1x18x16x4xbf16>
    %8 = vector.shape_cast %7 : vector<1x18x16x4xbf16> to vector<18x16x4xbf16>
    %c0_4 = arith.constant 0 : index
    %9 = arith.index_cast %2 : i32 to index
    %c2 = arith.constant 2 : index
    %c0_5 = arith.constant 0 : index
    %10 = vector.load %arg2[%c0_4, %9, %c2, %c0_5] : memref<1x18x18x4xbf16, #tpu.memory_space<vmem>>, vector<1x18x16x4xbf16>
    %11 = vector.shape_cast %10 : vector<1x18x16x4xbf16> to vector<18x16x4xbf16>
    %12 = tpu.concatenate %5, %8, %11 in 2 : vector<18x16x4xbf16>, vector<18x16x4xbf16>, vector<18x16x4xbf16> -> vector<18x16x12xbf16>
    %13 = vector.extract_strided_slice %12 {offsets = [0, 0, 0], sizes = [16, 16, 12], strides = [1, 1, 1]} : vector<18x16x12xbf16> to vector<16x16x12xbf16>
    %14 = vector.shape_cast %13 : vector<16x16x12xbf16> to vector<256x12xbf16>
    %c0_6 = arith.constant 0 : index
    %c0_7 = arith.constant 0 : index
    %c0_8 = arith.constant 0 : index
    %15 = vector.load %arg3[%c0_6, %c0_7, %c0_8] : memref<3x12x128xbf16, #tpu.memory_space<vmem>>, vector<1x12x128xbf16>
    %16 = vector.shape_cast %15 : vector<1x12x128xbf16> to vector<12x128xbf16>
    %cst = arith.constant dense<0.000000e+00> : vector<256x128xf32>
    %17 = tpu.matmul %14, %16, %cst {dimension_numbers = #tpu.dot_dimension_numbers<[1], [0], [0], [1], [0, 0, 1, 1], [], []>} : vector<256x12xbf16>, vector<12x128xbf16>, vector<256x128xf32> -> vector<256x128xf32>
    %c0_9 = arith.constant 0 : index
    %c0_10 = arith.constant 0 : index
    %18 = vector.load %arg6[%c0_9, %c0_10] : memref<256x128xf32, #tpu.memory_space<vmem>>, vector<256x128xf32>
    tpu.vector_store %arg6[%c0_9, %c0_10], %17 {strides = array<i32>} : memref<256x128xf32, #tpu.memory_space<vmem>>, vector<256x128xf32>,
    %19 = vector.extract_strided_slice %12 {offsets = [1, 0, 0], sizes = [16, 16, 12], strides = [1, 1, 1]} : vector<18x16x12xbf16> to vector<16x16x12xbf16>
    %20 = vector.shape_cast %19 : vector<16x16x12xbf16> to vector<256x12xbf16>
    %c1_11 = arith.constant 1 : index
    %c0_12 = arith.constant 0 : index
    %c0_13 = arith.constant 0 : index
    %21 = vector.load %arg3[%c1_11, %c0_12, %c0_13] : memref<3x12x128xbf16, #tpu.memory_space<vmem>>, vector<1x12x128xbf16>
    %22 = vector.shape_cast %21 : vector<1x12x128xbf16> to vector<12x128xbf16>
    %cst_14 = arith.constant dense<0.000000e+00> : vector<256x128xf32>
    %23 = tpu.matmul %20, %22, %cst_14 {dimension_numbers = #tpu.dot_dimension_numbers<[1], [0], [0], [1], [0, 0, 1, 1], [], []>} : vector<256x12xbf16>, vector<12x128xbf16>, vector<256x128xf32> -> vector<256x128xf32>
    %c0_15 = arith.constant 0 : index
    %c0_16 = arith.constant 0 : index
    %24 = vector.load %arg6[%c0_15, %c0_16] : memref<256x128xf32, #tpu.memory_space<vmem>>, vector<256x128xf32>
    %25 = arith.addf %24, %23 : vector<256x128xf32>
    %c0_17 = arith.constant 0 : index
    %c0_18 = arith.constant 0 : index
    %26 = vector.load %arg6[%c0_17, %c0_18] : memref<256x128xf32, #tpu.memory_space<vmem>>, vector<256x128xf32>
    tpu.vector_store %arg6[%c0_17, %c0_18], %25 {strides = array<i32>} : memref<256x128xf32, #tpu.memory_space<vmem>>, vector<256x128xf32>,
    %27 = vector.extract_strided_slice %12 {offsets = [2, 0, 0], sizes = [16, 16, 12], strides = [1, 1, 1]} : vector<18x16x12xbf16> to vector<16x16x12xbf16>
    %28 = vector.shape_cast %27 : vector<16x16x12xbf16> to vector<256x12xbf16>
    %c2_19 = arith.constant 2 : index
    %c0_20 = arith.constant 0 : index
    %c0_21 = arith.constant 0 : index
    %29 = vector.load %arg3[%c2_19, %c0_20, %c0_21] : memref<3x12x128xbf16, #tpu.memory_space<vmem>>, vector<1x12x128xbf16>
    %30 = vector.shape_cast %29 : vector<1x12x128xbf16> to vector<12x128xbf16>
    %cst_22 = arith.constant dense<0.000000e+00> : vector<256x128xf32>
    %31 = tpu.matmul %28, %30, %cst_22 {dimension_numbers = #tpu.dot_dimension_numbers<[1], [0], [0], [1], [0, 0, 1, 1], [], []>} : vector<256x12xbf16>, vector<12x128xbf16>, vector<256x128xf32> -> vector<256x128xf32>
    %c0_23 = arith.constant 0 : index
    %c0_24 = arith.constant 0 : index
    %32 = vector.load %arg6[%c0_23, %c0_24] : memref<256x128xf32, #tpu.memory_space<vmem>>, vector<256x128xf32>
    %33 = arith.addf %32, %31 : vector<256x128xf32>
    %c0_25 = arith.constant 0 : index
    %c0_26 = arith.constant 0 : index
    %34 = vector.load %arg6[%c0_25, %c0_26] : memref<256x128xf32, #tpu.memory_space<vmem>>, vector<256x128xf32>
    tpu.vector_store %arg6[%c0_25, %c0_26], %33 {strides = array<i32>} : memref<256x128xf32, #tpu.memory_space<vmem>>, vector<256x128xf32>,
    %c0_27 = arith.constant 0 : index
    %c0_28 = arith.constant 0 : index
    %35 = vector.load %arg6[%c0_27, %c0_28] : memref<256x128xf32, #tpu.memory_space<vmem>>, vector<256x128xf32>
    %36 = vector.shape_cast %35 : vector<256x128xf32> to vector<16x16x128xf32>
    %37 = arith.truncf %36 : vector<16x16x128xf32> to vector<16x16x128xbf16>
    %c0_29 = arith.constant 0 : index
    %c0_30 = arith.constant 0 : index
    %c0_31 = arith.constant 0 : index
    %c0_32 = arith.constant 0 : index
    %38 = vector.load %arg4[%c0_29, %c0_30, %c0_31, %c0_32] : memref<1x16x16x128xbf16, #tpu.memory_space<vmem>>, vector<1x16x16x128xbf16>
    %39 = vector.shape_cast %38 : vector<1x16x16x128xbf16> to vector<16x16x128xbf16>
    %40 = vector.shape_cast %37 : vector<16x16x128xbf16> to vector<1x16x16x128xbf16>
    tpu.vector_store %arg4[%c0_29, %c0_30, %c0_31, %c0_32], %40 {strides = array<i32>} : memref<1x16x16x128xbf16, #tpu.memory_space<vmem>>, vector<1x16x16x128xbf16>,
    %cst_33 = arith.constant dense<0.000000e+00> : vector<128xf32>
    %41 = vector.multi_reduction <add>, %35, %cst_33 [0] : vector<256x128xf32> to vector<128xf32>
    %42 = vector.shape_cast %41 : vector<128xf32> to vector<1x128xf32>
    %cst_34 = arith.constant 3.906250e-03 : f32
    %43 = vector.broadcast %cst_34 : f32 to vector<1x128xf32>
    %44 = arith.mulf %42, %43 : vector<1x128xf32>
    %45 = vector.broadcast %44 : vector<1x128xf32> to vector<256x128xf32>
    %46 = arith.subf %35, %45 : vector<256x128xf32>
    %c0_35 = arith.constant 0 : index
    %c0_36 = arith.constant 0 : index
    %c0_37 = arith.constant 0 : index
    %c0_38 = arith.constant 0 : index
    %47 = vector.load %arg5[%c0_35, %c0_36, %c0_37, %c0_38] : memref<1x1x2x128xf32, #tpu.memory_space<vmem>>, vector<1x1x1x128xf32>
    %48 = vector.shape_cast %47 : vector<1x1x1x128xf32> to vector<1x128xf32>
    %49 = vector.shape_cast %42 : vector<1x128xf32> to vector<1x1x1x128xf32>
    tpu.vector_store %arg5[%c0_35, %c0_36, %c0_37, %c0_38], %49 {strides = array<i32>} : memref<1x1x2x128xf32, #tpu.memory_space<vmem>>, vector<1x1x1x128xf32>,
    %50 = arith.mulf %46, %46 : vector<256x128xf32>
    %cst_39 = arith.constant dense<0.000000e+00> : vector<128xf32>
    %51 = vector.multi_reduction <add>, %50, %cst_39 [0] : vector<256x128xf32> to vector<128xf32>
    %52 = vector.shape_cast %51 : vector<128xf32> to vector<1x128xf32>
    %c0_40 = arith.constant 0 : index
    %c0_41 = arith.constant 0 : index
    %c1_42 = arith.constant 1 : index
    %c0_43 = arith.constant 0 : index
    %53 = vector.load %arg5[%c0_40, %c0_41, %c1_42, %c0_43] : memref<1x1x2x128xf32, #tpu.memory_space<vmem>>, vector<1x1x1x128xf32>
    %54 = vector.shape_cast %53 : vector<1x1x1x128xf32> to vector<1x128xf32>
    %55 = vector.shape_cast %52 : vector<1x128xf32> to vector<1x1x1x128xf32>
    tpu.vector_store %arg5[%c0_40, %c0_41, %c1_42, %c0_43], %55 {strides = array<i32>} : memref<1x1x2x128xf32, #tpu.memory_space<vmem>>, vector<1x1x1x128xf32>,
    return
  }
  func.func @transform_0(%arg0: i32, %arg1: i32) -> (i32, i32, i32, i32) {
    %c0_i32 = arith.constant 0 : i32
    %c0_i32_0 = arith.constant 0 : i32
    %c0_i32_1 = arith.constant 0 : i32
    %c0_i32_2 = arith.constant 0 : i32
    return %arg0, %c0_i32, %c0_i32_0, %c0_i32_1 : i32, i32, i32, i32
  }
  func.func @transform_1(%arg0: i32, %arg1: i32) -> (i32, i32, i32) {
    %c0_i32 = arith.constant 0 : i32
    %c0_i32_0 = arith.constant 0 : i32
    %c0_i32_1 = arith.constant 0 : i32
    %c0_i32_2 = arith.constant 0 : i32
    return %c0_i32, %c0_i32_0, %c0_i32_1 : i32, i32, i32
  }
  func.func @transform_2(%arg0: i32, %arg1: i32) -> (i32, i32, i32, i32) {
    %c0_i32 = arith.constant 0 : i32
    %c0_i32_0 = arith.constant 0 : i32
    %c0_i32_1 = arith.constant 0 : i32
    return %arg0, %arg1, %c0_i32, %c0_i32_0 : i32, i32, i32, i32
  }
  func.func @transform_3(%arg0: i32, %arg1: i32) -> (i32, i32, i32, i32) {
    %c0_i32 = arith.constant 0 : i32
    %c0_i32_0 = arith.constant 0 : i32
    %c0_i32_1 = arith.constant 0 : i32
    return %arg0, %arg1, %c0_i32, %c0_i32_0 : i32, i32, i32, i32
  }
}

module attributes {stable_mosaic.version = 11 : i64} {
  func.func @_bn_relu_kernel(%arg0: i32, %arg1: memref<512x128xbf16, #tpu.memory_space<vmem>>, %arg2: memref<1x128xf32, #tpu.memory_space<vmem>>, %arg3: memref<1x128xf32, #tpu.memory_space<vmem>>, %arg4: memref<512x128xf32, #tpu.memory_space<vmem>>) attributes {dimension_semantics = [#tpu.dimension_semantics<parallel>], iteration_bounds = array<i64: 1>, scalar_prefetch = 0 : i64, scratch_operands = 0 : i64, tpu.core_type = #tpu.core_type<tc>, window_params = [{transform_indices = @transform_0, window_bounds = array<i64: 512, 128>}, {pipeline_mode = #tpu.pipeline_mode<synchronous>, transform_indices = @transform_1, window_bounds = array<i64: 1, 128>}, {pipeline_mode = #tpu.pipeline_mode<synchronous>, transform_indices = @transform_2, window_bounds = array<i64: 1, 128>}, {transform_indices = @transform_3, window_bounds = array<i64: 512, 128>}]} {
    %c0 = arith.constant 0 : index
    %c0_0 = arith.constant 0 : index
    %0 = vector.load %arg1[%c0, %c0_0] : memref<512x128xbf16, #tpu.memory_space<vmem>>, vector<512x128xbf16>
    %1 = arith.extf %0 : vector<512x128xbf16> to vector<512x128xf32>
    %c0_1 = arith.constant 0 : index
    %c0_2 = arith.constant 0 : index
    %2 = vector.load %arg2[%c0_1, %c0_2] : memref<1x128xf32, #tpu.memory_space<vmem>>, vector<1x128xf32>
    %3 = vector.broadcast %2 : vector<1x128xf32> to vector<512x128xf32>
    %4 = arith.mulf %1, %3 : vector<512x128xf32>
    %c0_3 = arith.constant 0 : index
    %c0_4 = arith.constant 0 : index
    %5 = vector.load %arg3[%c0_3, %c0_4] : memref<1x128xf32, #tpu.memory_space<vmem>>, vector<1x128xf32>
    %6 = vector.broadcast %5 : vector<1x128xf32> to vector<512x128xf32>
    %7 = arith.addf %4, %6 : vector<512x128xf32>
    %cst = arith.constant 0.000000e+00 : f32
    %8 = vector.broadcast %cst : f32 to vector<512x128xf32>
    %9 = arith.maximumf %7, %8 : vector<512x128xf32>
    %c0_5 = arith.constant 0 : index
    %c0_6 = arith.constant 0 : index
    %10 = vector.load %arg4[%c0_5, %c0_6] : memref<512x128xf32, #tpu.memory_space<vmem>>, vector<512x128xf32>
    tpu.vector_store %arg4[%c0_5, %c0_6], %9 {strides = array<i32>} : memref<512x128xf32, #tpu.memory_space<vmem>>, vector<512x128xf32>,
    return
  }
  func.func @transform_0(%arg0: i32) -> (i32, i32) {
    %c0_i32 = arith.constant 0 : i32
    %c0_i32_0 = arith.constant 0 : i32
    return %arg0, %c0_i32 : i32, i32
  }
  func.func @transform_1(%arg0: i32) -> (i32, i32) {
    %c0_i32 = arith.constant 0 : i32
    %c0_i32_0 = arith.constant 0 : i32
    %c0_i32_1 = arith.constant 0 : i32
    return %c0_i32, %c0_i32_0 : i32, i32
  }
  func.func @transform_2(%arg0: i32) -> (i32, i32) {
    %c0_i32 = arith.constant 0 : i32
    %c0_i32_0 = arith.constant 0 : i32
    %c0_i32_1 = arith.constant 0 : i32
    return %c0_i32, %c0_i32_0 : i32, i32
  }
  func.func @transform_3(%arg0: i32) -> (i32, i32) {
    %c0_i32 = arith.constant 0 : i32
    %c0_i32_0 = arith.constant 0 : i32
    return %arg0, %c0_i32 : i32, i32
  }
}

</mosaic_0001>

<llo_original>
// kernel: _unet_conv_block_impl.3
$region0: #{_unet_conv_block_impl.3}
  #allocation0 [shape = 'u32[]', space=smem, size = 0x4, offset = 0x4, fixed_abs, tag = 'smem constant byte address 0x4 - core index']
  #allocation1 [shape = 'u32[144,128]{1,0:T(1,128)}', space=vmem, size = 0x12000, scoped, tag = 'internal scratch']
  %s0 = inlined_call_operand.vmem [shape: bf16[512,128], index: 0, kind: input, shape index: {}]
  %s1 = inlined_call_operand.vmem [shape: f32[1,128], index: 1, kind: input, shape index: {}]
  %s2 = inlined_call_operand.vmem [shape: f32[1,128], index: 2, kind: input, shape index: {}]
  %s3 = inlined_call_operand.vmem [shape: f32[512,128], index: 3, kind: output, shape index: {}]
  %s4 = sld [smem:[#allocation0]]
  $region22: #{_unet_conv_block_impl.3} parent=0
    _
  %s6 = ssub.s32 1, %s4
  %s7 = scalar_select 0, %s6, %s4
  // Predicated region
  $region2: #{_unet_conv_block_impl.3} parent=0 // pred_check
    _
  $region3: #{_unet_conv_block_impl.3} parent=0 // pred_check_branch
    %9 = sbr.rel (0) target = $region5
  $region4: #{_unet_conv_block_impl.3} parent=0 // pred_region
    _
  $region5: #{_unet_conv_block_impl.3} parent=0 // pred_fallthru
    _
  // Predicated region
  $region6: #{_unet_conv_block_impl.3} parent=0 // pred_check
    _
  $region7: #{_unet_conv_block_impl.3} parent=0 // pred_check_branch
    %11 = sbr.rel (0) target = $region9
  $region8: #{_unet_conv_block_impl.3} parent=0 // pred_region
    _
  $region9: #{_unet_conv_block_impl.3} parent=0 // pred_fallthru
    _
  // Predicated region
  $region10: #{_unet_conv_block_impl.3} parent=0 // pred_check
    _
  $region11: #{_unet_conv_block_impl.3} parent=0 // pred_check_branch
    %13 = sbr.rel (0) target = $region13
  $region12: #{_unet_conv_block_impl.3} parent=0 // pred_region
    _
  $region13: #{_unet_conv_block_impl.3} parent=0 // pred_fallthru
    _
  %v14 = vld [vmem:[%s0] sm:$0xf]
  %v15 = vld [vmem:[%s0 + $0x4] sm:$0xf]
  %v16 = vld [vmem:[%s0 + $0x8] sm:$0xf]
  %v17 = vld [vmem:[%s0 + $0xc] sm:$0xf]
  %v18 = vld [vmem:[%s0 + $0x10] sm:$0xf]
  %v19 = vld [vmem:[%s0 + $0x14] sm:$0xf]
  %v20 = vld [vmem:[%s0 + $0x18] sm:$0xf]
  %v21 = vld [vmem:[%s0 + $0x1c] sm:$0xf]
  %v22 = vld [vmem:[%s0 + $0x20] sm:$0xf]
  %v23 = vld [vmem:[%s0 + $0x24] sm:$0xf]
  %v24 = vld [vmem:[%s0 + $0x28] sm:$0xf]
  %v25 = vld [vmem:[%s0 + $0x2c] sm:$0xf]
  %v26 = vld [vmem:[%s0 + $0x30] sm:$0xf]
  %v27 = vld [vmem:[%s0 + $0x34] sm:$0xf]
  %v28 = vld [vmem:[%s0 + $0x38] sm:$0xf]
  %v29 = vld [vmem:[%s0 + $0x3c] sm:$0xf]
  %v30 = vld [vmem:[%s0 + $0x40] sm:$0xf]
  %v31 = vld [vmem:[%s0 + $0x44] sm:$0xf]
  %v32 = vld [vmem:[%s0 + $0x48] sm:$0xf]
  %v33 = vld [vmem:[%s0 + $0x4c] sm:$0xf]
  %v34 = vld [vmem:[%s0 + $0x50] sm:$0xf]
  %v35 = vld [vmem:[%s0 + $0x54] sm:$0xf]
  %v36 = vld [vmem:[%s0 + $0x58] sm:$0xf]
  %v37 = vld [vmem:[%s0 + $0x5c] sm:$0xf]
  %v38 = vld [vmem:[%s0 + $0x60] sm:$0xf]
  %v39 = vld [vmem:[%s0 + $0x64] sm:$0xf]
  %v40 = vld [vmem:[%s0 + $0x68] sm:$0xf]
  %v41 = vld [vmem:[%s0 + $0x6c] sm:$0xf]
  %v42 = vld [vmem:[%s0 + $0x70] sm:$0xf]
  %v43 = vld [vmem:[%s0 + $0x74] sm:$0xf]
  %v44 = vld [vmem:[%s0 + $0x78] sm:$0xf]
  %v45 = vld [vmem:[%s0 + $0x7c] sm:$0xf]
  %v46 = vld [vmem:[%s0 + $0x80] sm:$0xf]
  %v47 = vld [vmem:[%s0 + $0x84] sm:$0xf]
  %v48 = vld [vmem:[%s0 + $0x88] sm:$0xf]
  %v49 = vld [vmem:[%s0 + $0x8c] sm:$0xf]
  %v50 = vld [vmem:[%s0 + $0x90] sm:$0xf]
  %v51 = vld [vmem:[%s0 + $0x94] sm:$0xf]
  %v52 = vld [vmem:[%s0 + $0x98] sm:$0xf]
  %v53 = vld [vmem:[%s0 + $0x9c] sm:$0xf]
  %v54 = vld [vmem:[%s0 + $0xa0] sm:$0xf]
  %v55 = vld [vmem:[%s0 + $0xa4] sm:$0xf]
  %v56 = vld [vmem:[%s0 + $0xa8] sm:$0xf]
  %v57 = vld [vmem:[%s0 + $0xac] sm:$0xf]
  %v58 = vld [vmem:[%s0 + $0xb0] sm:$0xf]
  %v59 = vld [vmem:[%s0 + $0xb4] sm:$0xf]
  %v60 = vld [vmem:[%s0 + $0xb8] sm:$0xf]
  %v61 = vld [vmem:[%s0 + $0xbc] sm:$0xf]
  %v62 = vld [vmem:[%s0 + $0xc0] sm:$0xf]
  %v63 = vld [vmem:[%s0 + $0xc4] sm:$0xf]
  %v64 = vld [vmem:[%s0 + $0xc8] sm:$0xf]
  %v65 = vld [vmem:[%s0 + $0xcc] sm:$0xf]
  %v66 = vld [vmem:[%s0 + $0xd0] sm:$0xf]
  %v67 = vld [vmem:[%s0 + $0xd4] sm:$0xf]
  %v68 = vld [vmem:[%s0 + $0xd8] sm:$0xf]
  %v69 = vld [vmem:[%s0 + $0xdc] sm:$0xf]
  %v70 = vld [vmem:[%s0 + $0xe0] sm:$0xf]
  %v71 = vld [vmem:[%s0 + $0xe4] sm:$0xf]
  %v72 = vld [vmem:[%s0 + $0xe8] sm:$0xf]
  %v73 = vld [vmem:[%s0 + $0xec] sm:$0xf]
  %v74 = vld [vmem:[%s0 + $0xf0] sm:$0xf]
  %v75 = vld [vmem:[%s0 + $0xf4] sm:$0xf]
  %v76 = vld [vmem:[%s0 + $0xf8] sm:$0xf]
  %v77 = vld [vmem:[%s0 + $0xfc] sm:$0xf]
  %v78 = vunpack.c.l.bf16 %v14
  %v79 = vunpack.c.l.bf16 %v15
  %v80 = vunpack.c.l.bf16 %v16
  %v81 = vunpack.c.l.bf16 %v17
  %v82 = vunpack.c.l.bf16 %v18
  %v83 = vunpack.c.l.bf16 %v19
  %v84 = vunpack.c.l.bf16 %v20
  %v85 = vunpack.c.l.bf16 %v21
  %v86 = vunpack.c.l.bf16 %v22
  %v87 = vunpack.c.l.bf16 %v23
  %v88 = vunpack.c.l.bf16 %v24
  %v89 = vunpack.c.l.bf16 %v25
  %v90 = vunpack.c.l.bf16 %v26
  %v91 = vunpack.c.l.bf16 %v27
  %v92 = vunpack.c.l.bf16 %v28
  %v93 = vunpack.c.l.bf16 %v29
  %v94 = vunpack.c.l.bf16 %v30
  %v95 = vunpack.c.l.bf16 %v31
  %v96 = vunpack.c.l.bf16 %v32
  %v97 = vunpack.c.l.bf16 %v33
  %v98 = vunpack.c.l.bf16 %v34
  %v99 = vunpack.c.l.bf16 %v35
  %v100 = vunpack.c.l.bf16 %v36
  %v101 = vunpack.c.l.bf16 %v37
  %v102 = vunpack.c.l.bf16 %v38
  %v103 = vunpack.c.l.bf16 %v39
  %v104 = vunpack.c.l.bf16 %v40
  %v105 = vunpack.c.l.bf16 %v41
  %v106 = vunpack.c.l.bf16 %v42
  %v107 = vunpack.c.l.bf16 %v43
  %v108 = vunpack.c.l.bf16 %v44
  %v109 = vunpack.c.l.bf16 %v45
  %v110 = vunpack.c.l.bf16 %v46
  %v111 = vunpack.c.l.bf16 %v47
  %v112 = vunpack.c.l.bf16 %v48
  %v113 = vunpack.c.l.bf16 %v49
  %v114 = vunpack.c.l.bf16 %v50
  %v115 = vunpack.c.l.bf16 %v51
  %v116 = vunpack.c.l.bf16 %v52
  %v117 = vunpack.c.l.bf16 %v53
  %v118 = vunpack.c.l.bf16 %v54
  %v119 = vunpack.c.l.bf16 %v55
  %v120 = vunpack.c.l.bf16 %v56
  %v121 = vunpack.c.l.bf16 %v57
  %v122 = vunpack.c.l.bf16 %v58
  %v123 = vunpack.c.l.bf16 %v59
  %v124 = vunpack.c.l.bf16 %v60
  %v125 = vunpack.c.l.bf16 %v61
  %v126 = vunpack.c.l.bf16 %v62
  %v127 = vunpack.c.l.bf16 %v63
  %v128 = vunpack.c.l.bf16 %v64
  %v129 = vunpack.c.l.bf16 %v65
  %v130 = vunpack.c.l.bf16 %v66
  %v131 = vunpack.c.l.bf16 %v67
  %v132 = vunpack.c.l.bf16 %v68
  %v133 = vunpack.c.l.bf16 %v69
  %v134 = vunpack.c.l.bf16 %v70
  %v135 = vunpack.c.l.bf16 %v71
  %v136 = vunpack.c.l.bf16 %v72
  %v137 = vunpack.c.l.bf16 %v73
  %v138 = vunpack.c.l.bf16 %v74
  %v139 = vunpack.c.l.bf16 %v75
  %v140 = vunpack.c.l.bf16 %v76
  %v141 = vunpack.c.l.bf16 %v77
  %v142 = vld [vmem:[%s1] sm:$0x1]
  %v144 = vlaneseq
  %v145 = vshrl.u32 %v144, 7
  %v146 = vsub.s32 0, %v145
  %v147 = vrot.slane %v142, %v146
  %v149 = vmul.f32 %v78, %v147
  %v150 = vmul.f32 %v79, %v147
  %v151 = vmul.f32 %v80, %v147
  %v152 = vmul.f32 %v81, %v147
  %v153 = vmul.f32 %v82, %v147
  %v154 = vmul.f32 %v83, %v147
  %v155 = vmul.f32 %v84, %v147
  %v156 = vmul.f32 %v85, %v147
  %v157 = vmul.f32 %v86, %v147
  %v158 = vmul.f32 %v87, %v147
  %v159 = vmul.f32 %v88, %v147
  %v160 = vmul.f32 %v89, %v147
  %v161 = vmul.f32 %v90, %v147
  %v162 = vmul.f32 %v91, %v147
  %v163 = vmul.f32 %v92, %v147
  %v164 = vmul.f32 %v93, %v147
  %v165 = vmul.f32 %v94, %v147
  %v166 = vmul.f32 %v95, %v147
  %v167 = vmul.f32 %v96, %v147
  %v168 = vmul.f32 %v97, %v147
  %v169 = vmul.f32 %v98, %v147
  %v170 = vmul.f32 %v99, %v147
  %v171 = vmul.f32 %v100, %v147
  %v172 = vmul.f32 %v101, %v147
  %v173 = vmul.f32 %v102, %v147
  %v174 = vmul.f32 %v103, %v147
  %v175 = vmul.f32 %v104, %v147
  %v176 = vmul.f32 %v105, %v147
  %v177 = vmul.f32 %v106, %v147
  %v178 = vmul.f32 %v107, %v147
  %v179 = vmul.f32 %v108, %v147
  %v180 = vmul.f32 %v109, %v147
  %v181 = vmul.f32 %v110, %v147
  %v182 = vmul.f32 %v111, %v147
  %v183 = vmul.f32 %v112, %v147
  %v184 = vmul.f32 %v113, %v147
  %v185 = vmul.f32 %v114, %v147
  %v186 = vmul.f32 %v115, %v147
  %v187 = vmul.f32 %v116, %v147
  %v188 = vmul.f32 %v117, %v147
  %v189 = vmul.f32 %v118, %v147
  %v190 = vmul.f32 %v119, %v147
  %v191 = vmul.f32 %v120, %v147
  %v192 = vmul.f32 %v121, %v147
  %v193 = vmul.f32 %v122, %v147
  %v194 = vmul.f32 %v123, %v147
  %v195 = vmul.f32 %v124, %v147
  %v196 = vmul.f32 %v125, %v147
  %v197 = vmul.f32 %v126, %v147
  %v198 = vmul.f32 %v127, %v147
  %v199 = vmul.f32 %v128, %v147
  %v200 = vmul.f32 %v129, %v147
  %v201 = vmul.f32 %v130, %v147
  %v202 = vmul.f32 %v131, %v147
  %v203 = vmul.f32 %v132, %v147
  %v204 = vmul.f32 %v133, %v147
  %v205 = vmul.f32 %v134, %v147
  %v206 = vmul.f32 %v135, %v147
  %v207 = vmul.f32 %v136, %v147
  %v208 = vmul.f32 %v137, %v147
  %v209 = vmul.f32 %v138, %v147
  %v210 = vmul.f32 %v139, %v147
  %v211 = vmul.f32 %v140, %v147
  %v212 = vmul.f32 %v141, %v147
  %v213 = vld [vmem:[%s2] sm:$0x1]
  %v215 = vlaneseq
  %v216 = vshrl.u32 %v215, 7
  %v217 = vsub.s32 0, %v216
  %v218 = vrot.slane %v213, %v217
  %v220 = vadd.f32 %v149, %v218
  %v221 = vadd.f32 %v150, %v218
  %v222 = vadd.f32 %v151, %v218
  %v223 = vadd.f32 %v152, %v218
  %v224 = vadd.f32 %v153, %v218
  %v225 = vadd.f32 %v154, %v218
  %v226 = vadd.f32 %v155, %v218
  %v227 = vadd.f32 %v156, %v218
  %v228 = vadd.f32 %v157, %v218
  %v229 = vadd.f32 %v158, %v218
  %v230 = vadd.f32 %v159, %v218
  %v231 = vadd.f32 %v160, %v218
  %v232 = vadd.f32 %v161, %v218
  %v233 = vadd.f32 %v162, %v218
  %v234 = vadd.f32 %v163, %v218
  %v235 = vadd.f32 %v164, %v218
  %v236 = vadd.f32 %v165, %v218
  %v237 = vadd.f32 %v166, %v218
  %v238 = vadd.f32 %v167, %v218
  %v239 = vadd.f32 %v168, %v218
  %v240 = vadd.f32 %v169, %v218
  %v241 = vadd.f32 %v170, %v218
  %v242 = vadd.f32 %v171, %v218
  %v243 = vadd.f32 %v172, %v218
  %v244 = vadd.f32 %v173, %v218
  %v245 = vadd.f32 %v174, %v218
  %v246 = vadd.f32 %v175, %v218
  %v247 = vadd.f32 %v176, %v218
  %v248 = vadd.f32 %v177, %v218
  %v249 = vadd.f32 %v178, %v218
  %v250 = vadd.f32 %v179, %v218
  %v251 = vadd.f32 %v180, %v218
  %v252 = vadd.f32 %v181, %v218
  %v253 = vadd.f32 %v182, %v218
  %v254 = vadd.f32 %v183, %v218
  %v255 = vadd.f32 %v184, %v218
  %v256 = vadd.f32 %v185, %v218
  %v257 = vadd.f32 %v186, %v218
  %v258 = vadd.f32 %v187, %v218
  %v259 = vadd.f32 %v188, %v218
  %v260 = vadd.f32 %v189, %v218
  %v261 = vadd.f32 %v190, %v218
  %v262 = vadd.f32 %v191, %v218
  %v263 = vadd.f32 %v192, %v218
  %v264 = vadd.f32 %v193, %v218
  %v265 = vadd.f32 %v194, %v218
  %v266 = vadd.f32 %v195, %v218
  %v267 = vadd.f32 %v196, %v218
  %v268 = vadd.f32 %v197, %v218
  %v269 = vadd.f32 %v198, %v218
  %v270 = vadd.f32 %v199, %v218
  %v271 = vadd.f32 %v200, %v218
  %v272 = vadd.f32 %v201, %v218
  %v273 = vadd.f32 %v202, %v218
  %v274 = vadd.f32 %v203, %v218
  %v275 = vadd.f32 %v204, %v218
  %v276 = vadd.f32 %v205, %v218
  %v277 = vadd.f32 %v206, %v218
  %v278 = vadd.f32 %v207, %v218
  %v279 = vadd.f32 %v208, %v218
  %v280 = vadd.f32 %v209, %v218
  %v281 = vadd.f32 %v210, %v218
  %v282 = vadd.f32 %v211, %v218
  %v283 = vadd.f32 %v212, %v218
  %v284 = vmax.f32 %v220, 0.0
  %v285 = vmax.f32 %v221, 0.0
  %v286 = vmax.f32 %v222, 0.0
  %v287 = vmax.f32 %v223, 0.0
  %v288 = vmax.f32 %v224, 0.0
  %v289 = vmax.f32 %v225, 0.0
  %v290 = vmax.f32 %v226, 0.0
  %v291 = vmax.f32 %v227, 0.0
  %v292 = vmax.f32 %v228, 0.0
  %v293 = vmax.f32 %v229, 0.0
  %v294 = vmax.f32 %v230, 0.0
  %v295 = vmax.f32 %v231, 0.0
  %v296 = vmax.f32 %v232, 0.0
  %v297 = vmax.f32 %v233, 0.0
  %v298 = vmax.f32 %v234, 0.0
  %v299 = vmax.f32 %v235, 0.0
  %v300 = vmax.f32 %v236, 0.0
  %v301 = vmax.f32 %v237, 0.0
  %v302 = vmax.f32 %v238, 0.0
  %v303 = vmax.f32 %v239, 0.0
  %v304 = vmax.f32 %v240, 0.0
  %v305 = vmax.f32 %v241, 0.0
  %v306 = vmax.f32 %v242, 0.0
  %v307 = vmax.f32 %v243, 0.0
  %v308 = vmax.f32 %v244, 0.0
  %v309 = vmax.f32 %v245, 0.0
  %v310 = vmax.f32 %v246, 0.0
  %v311 = vmax.f32 %v247, 0.0
  %v312 = vmax.f32 %v248, 0.0
  %v313 = vmax.f32 %v249, 0.0
  %v314 = vmax.f32 %v250, 0.0
  %v315 = vmax.f32 %v251, 0.0
  %v316 = vmax.f32 %v252, 0.0
  %v317 = vmax.f32 %v253, 0.0
  %v318 = vmax.f32 %v254, 0.0
  %v319 = vmax.f32 %v255, 0.0
  %v320 = vmax.f32 %v256, 0.0
  %v321 = vmax.f32 %v257, 0.0
  %v322 = vmax.f32 %v258, 0.0
  %v323 = vmax.f32 %v259, 0.0
  %v324 = vmax.f32 %v260, 0.0
  %v325 = vmax.f32 %v261, 0.0
  %v326 = vmax.f32 %v262, 0.0
  %v327 = vmax.f32 %v263, 0.0
  %v328 = vmax.f32 %v264, 0.0
  %v329 = vmax.f32 %v265, 0.0
  %v330 = vmax.f32 %v266, 0.0
  %v331 = vmax.f32 %v267, 0.0
  %v332 = vmax.f32 %v268, 0.0
  %v333 = vmax.f32 %v269, 0.0
  %v334 = vmax.f32 %v270, 0.0
  %v335 = vmax.f32 %v271, 0.0
  %v336 = vmax.f32 %v272, 0.0
  %v337 = vmax.f32 %v273, 0.0
  %v338 = vmax.f32 %v274, 0.0
  %v339 = vmax.f32 %v275, 0.0
  %v340 = vmax.f32 %v276, 0.0
  %v341 = vmax.f32 %v277, 0.0
  %v342 = vmax.f32 %v278, 0.0
  %v343 = vmax.f32 %v279, 0.0
  %v344 = vmax.f32 %v280, 0.0
  %v345 = vmax.f32 %v281, 0.0
  %v346 = vmax.f32 %v282, 0.0
  %v347 = vmax.f32 %v283, 0.0
  %348 = vst [vmem:[%s3] sm:$0xff] %v284
  %349 = vst [vmem:[%s3 + $0x8] sm:$0xff] %v285
  %350 = vst [vmem:[%s3 + $0x10] sm:$0xff] %v286
  %351 = vst [vmem:[%s3 + $0x18] sm:$0xff] %v287
  %352 = vst [vmem:[%s3 + $0x20] sm:$0xff] %v288
  %353 = vst [vmem:[%s3 + $0x28] sm:$0xff] %v289
  %354 = vst [vmem:[%s3 + $0x30] sm:$0xff] %v290
  %355 = vst [vmem:[%s3 + $0x38] sm:$0xff] %v291
  %356 = vst [vmem:[%s3 + $0x40] sm:$0xff] %v292
  %357 = vst [vmem:[%s3 + $0x48] sm:$0xff] %v293
  %358 = vst [vmem:[%s3 + $0x50] sm:$0xff] %v294
  %359 = vst [vmem:[%s3 + $0x58] sm:$0xff] %v295
  %360 = vst [vmem:[%s3 + $0x60] sm:$0xff] %v296
  %361 = vst [vmem:[%s3 + $0x68] sm:$0xff] %v297
  %362 = vst [vmem:[%s3 + $0x70] sm:$0xff] %v298
  %363 = vst [vmem:[%s3 + $0x78] sm:$0xff] %v299
  %364 = vst [vmem:[%s3 + $0x80] sm:$0xff] %v300
  %365 = vst [vmem:[%s3 + $0x88] sm:$0xff] %v301
  %366 = vst [vmem:[%s3 + $0x90] sm:$0xff] %v302
  %367 = vst [vmem:[%s3 + $0x98] sm:$0xff] %v303
  %368 = vst [vmem:[%s3 + $0xa0] sm:$0xff] %v304
  %369 = vst [vmem:[%s3 + $0xa8] sm:$0xff] %v305
  %370 = vst [vmem:[%s3 + $0xb0] sm:$0xff] %v306
  %371 = vst [vmem:[%s3 + $0xb8] sm:$0xff] %v307
  %372 = vst [vmem:[%s3 + $0xc0] sm:$0xff] %v308
  %373 = vst [vmem:[%s3 + $0xc8] sm:$0xff] %v309
  %374 = vst [vmem:[%s3 + $0xd0] sm:$0xff] %v310
  %375 = vst [vmem:[%s3 + $0xd8] sm:$0xff] %v311
  %376 = vst [vmem:[%s3 + $0xe0] sm:$0xff] %v312
  %377 = vst [vmem:[%s3 + $0xe8] sm:$0xff] %v313
  %378 = vst [vmem:[%s3 + $0xf0] sm:$0xff] %v314
  %379 = vst [vmem:[%s3 + $0xf8] sm:$0xff] %v315
  %380 = vst [vmem:[%s3 + $0x100] sm:$0xff] %v316
  %381 = vst [vmem:[%s3 + $0x108] sm:$0xff] %v317
  %382 = vst [vmem:[%s3 + $0x110] sm:$0xff] %v318
  %383 = vst [vmem:[%s3 + $0x118] sm:$0xff] %v319
  %384 = vst [vmem:[%s3 + $0x120] sm:$0xff] %v320
  %385 = vst [vmem:[%s3 + $0x128] sm:$0xff] %v321
  %386 = vst [vmem:[%s3 + $0x130] sm:$0xff] %v322
  %387 = vst [vmem:[%s3 + $0x138] sm:$0xff] %v323
  %388 = vst [vmem:[%s3 + $0x140] sm:$0xff] %v324
  %389 = vst [vmem:[%s3 + $0x148] sm:$0xff] %v325
  %390 = vst [vmem:[%s3 + $0x150] sm:$0xff] %v326
  %391 = vst [vmem:[%s3 + $0x158] sm:$0xff] %v327
  %392 = vst [vmem:[%s3 + $0x160] sm:$0xff] %v328
  %393 = vst [vmem:[%s3 + $0x168] sm:$0xff] %v329
  %394 = vst [vmem:[%s3 + $0x170] sm:$0xff] %v330
  %395 = vst [vmem:[%s3 + $0x178] sm:$0xff] %v331
  %396 = vst [vmem:[%s3 + $0x180] sm:$0xff] %v332
  %397 = vst [vmem:[%s3 + $0x188] sm:$0xff] %v333
  %398 = vst [vmem:[%s3 + $0x190] sm:$0xff] %v334
  %399 = vst [vmem:[%s3 + $0x198] sm:$0xff] %v335
  %400 = vst [vmem:[%s3 + $0x1a0] sm:$0xff] %v336
  %401 = vst [vmem:[%s3 + $0x1a8] sm:$0xff] %v337
  %402 = vst [vmem:[%s3 + $0x1b0] sm:$0xff] %v338
  %403 = vst [vmem:[%s3 + $0x1b8] sm:$0xff] %v339
  %404 = vst [vmem:[%s3 + $0x1c0] sm:$0xff] %v340
  %405 = vst [vmem:[%s3 + $0x1c8] sm:$0xff] %v341
  %406 = vst [vmem:[%s3 + $0x1d0] sm:$0xff] %v342
  %407 = vst [vmem:[%s3 + $0x1d8] sm:$0xff] %v343
  %408 = vst [vmem:[%s3 + $0x1e0] sm:$0xff] %v344
  %409 = vst [vmem:[%s3 + $0x1e8] sm:$0xff] %v345
  %410 = vst [vmem:[%s3 + $0x1f0] sm:$0xff] %v346
  %411 = vst [vmem:[%s3 + $0x1f8] sm:$0xff] %v347
  // Predicated region
  $region14: #{_unet_conv_block_impl.3} parent=0 // pred_check
    _
  $region15: #{_unet_conv_block_impl.3} parent=0 // pred_check_branch
    %413 = sbr.rel (0) target = $region17
  $region16: #{_unet_conv_block_impl.3} parent=0 // pred_region
    _
  $region17: #{_unet_conv_block_impl.3} parent=0 // pred_fallthru
    _
  // Predicated region
  $region18: #{_unet_conv_block_impl.3} parent=0 // pred_check
    _
  $region19: #{_unet_conv_block_impl.3} parent=0 // pred_check_branch
    %415 = sbr.rel (0) target = $region21
  $region20: #{_unet_conv_block_impl.3} parent=0 // pred_region
    _
  $region21: #{_unet_conv_block_impl.3} parent=0 // pred_fallthru
    _

// kernel: _unet_conv_block_impl.2
$region0: #{_unet_conv_block_impl.2}
  #allocation0 [shape = 'u32[]', space=smem, size = 0x4, offset = 0x4, fixed_abs, tag = 'smem constant byte address 0x4 - core index']
  #allocation1 [shape = 'u32[144,128]{1,0:T(1,128)}', space=vmem, size = 0x12000, scoped, tag = 'internal scratch']
  #allocation2 [shape = 'f32[256,128]{1,0:T(8,128)}', space=vmem, size = 0x20000, scoped, tag = 'scratch operand']
  %s0 = inlined_call_operand.vmem [shape: bf16[2,18,18,4], index: 0, kind: input, shape index: {}]
  %s1 = inlined_call_operand.vmem [shape: bf16[3,12,128], index: 1, kind: input, shape index: {}]
  %s2 = inlined_call_operand.vmem [shape: bf16[2,16,16,128], index: 2, kind: output, shape index: {0}]
  %s3 = inlined_call_operand.vmem [shape: f32[2,1,2,128], index: 3, kind: output, shape index: {1}]
  %4 = xla_tuple %s2, %s3
  %s5 = sld [smem:[#allocation0]]
  $region49: #{_unet_conv_block_impl.2} parent=0
    _
  %s7 = ssub.s32 1, %s5
  %s8 = scalar_select 0, %s7, %s5
  loop: start=0, step=1, limit=4
  $region2: #{_unet_conv_block_impl.2} parent=0 // loop_pre_header
    _
  $region3: #{_unet_conv_block_impl.2} parent=0 // loop_header
    %s10 = sphi 0, %s14
    %p11 = scmp.ge.s32.totalorder %s10, 4
    %s17 = sphi 0, %s29
    %s18 = sphi 0, %s25
    %s19 = sphi 0, %s17
    %s20 = sphi 0, %s18
    %s21 = sphi 0, %s19
    %s22 = sphi 0, %s20
    %s32 = sphi 0, %s34
    %s35 = sphi 0, %s32
    %s36 = sphi 0, %s35
    %s52 = sphi 0, %s36
    %s56 = sphi 0, %s56
    %s58 = sphi 0, %s56
    %s59 = sphi 0, %s58
    %s73 = sphi 0, %s59
    %s81 = sphi 0, %s83
    %s84 = sphi 0, %s81
    %s85 = sphi 0, %s84
    %s101 = sphi 0, %s85
    %s109 = sphi 0, %s111
    %s112 = sphi 0, %s109
    %s113 = sphi 0, %s112
    %s129 = sphi 0, %s113
  $region4: #{_unet_conv_block_impl.2} parent=0 // loop_header_branch
    %13 = sbr.rel (%p11) target = $region8
  $region5: #{_unet_conv_block_impl.2} parent=0 // loop_body
    %s15 = ssub.s32 %s10, 1
    %s16 = ssub.s32 %s10, 2
    %s23 = sadd.s32 1, %s18
    %p24 = scmp.ge.s32.totalorder %s23, 1
    %s25 = scalar_select %p24, 0, %s23
    %s26 = sadd.s32 1, %s17
    %s27 = scalar_select %p24, %s26, %s17
    %p28 = scmp.ge.s32.totalorder %s27, 2
    %s29 = scalar_select %p28, 0, %s27
    %s30 = ssub.s32 %s17, %s29
    %p31 = scmp.eq.s32.totalorder %s30, 0
    %s33 = sadd.s32 %s32, 1
    %s34 = scalar_select %p31, %s32, %s33
    %p37 = pneg %p31
    %p38 = scmp.eq.s32.totalorder %s10, 1
    %p39 = por %p37, %p38
    %p40 = scmp.ne.s32.totalorder %s32, %s35
    %p41 = scmp.eq.s32.totalorder %s10, 0
    %p42 = por %p40, %p41
    %p43 = scmp.ne.s32.totalorder %s32, %s35
    %p44 = scmp.eq.s32.totalorder %s15, 1
    %p45 = por %p43, %p44
    %p46 = scmp.ne.s32.totalorder %s35, %s36
    %p47 = scmp.eq.s32.totalorder %s15, 0
    %p48 = por %p46, %p47
    %p49 = scmp.ne.s32.totalorder %s35, %s36
    %p50 = scmp.eq.s32.totalorder %s16, 1
    %p51 = por %p49, %p50
    %p53 = scmp.ne.s32.totalorder %s36, %s52
    %p54 = scmp.eq.s32.totalorder %s16, 0
    %p55 = por %p53, %p54
    %s57 = sadd.s32 %s56, 1
    %p60 = scmp.eq.s32.totalorder %s10, 1
    %p61 = scmp.ne.s32.totalorder %s56, %s58
    %p62 = scmp.eq.s32.totalorder %s10, 0
    %p63 = por %p61, %p62
    %p64 = scmp.ne.s32.totalorder %s56, %s58
    %p65 = scmp.eq.s32.totalorder %s15, 1
    %p66 = por %p64, %p65
    %p67 = scmp.ne.s32.totalorder %s58, %s59
    %p68 = scmp.eq.s32.totalorder %s15, 0
    %p69 = por %p67, %p68
    %p70 = scmp.ne.s32.totalorder %s58, %s59
    %p71 = scmp.eq.s32.totalorder %s16, 1
    %p72 = por %p70, %p71
    %p74 = scmp.ne.s32.totalorder %s59, %s73
    %p75 = scmp.eq.s32.totalorder %s16, 0
    %p76 = por %p74, %p75
    %s77 = ssub.s32 %s17, %s29
    %s78 = ssub.s32 %s18, %s25
    %s79 = sor.u32 %s77, %s78
    %p80 = scmp.eq.s32.totalorder %s79, 0
    %s82 = sadd.s32 %s81, 1
    %s83 = scalar_select %p80, %s81, %s82
    %p86 = pneg %p80
    %p87 = scmp.eq.s32.totalorder %s10, 1
    %p88 = por %p86, %p87
    %p89 = scmp.ne.s32.totalorder %s81, %s84
    %p90 = scmp.eq.s32.totalorder %s10, 0
    %p91 = por %p89, %p90
    %p92 = scmp.ne.s32.totalorder %s81, %s84
    %p93 = scmp.eq.s32.totalorder %s15, 1
    %p94 = por %p92, %p93
    %p95 = scmp.ne.s32.totalorder %s84, %s85
    %p96 = scmp.eq.s32.totalorder %s15, 0
    %p97 = por %p95, %p96
    %p98 = scmp.ne.s32.totalorder %s84, %s85
    %p99 = scmp.eq.s32.totalorder %s16, 1
    %p100 = por %p98, %p99
    %p102 = scmp.ne.s32.totalorder %s85, %s101
    %p103 = scmp.eq.s32.totalorder %s16, 0
    %p104 = por %p102, %p103
    %s105 = ssub.s32 %s17, %s29
    %s106 = ssub.s32 %s18, %s25
    %s107 = sor.u32 %s105, %s106
    %p108 = scmp.eq.s32.totalorder %s107, 0
    %s110 = sadd.s32 %s109, 1
    %s111 = scalar_select %p108, %s109, %s110
    %p114 = pneg %p108
    %p115 = scmp.eq.s32.totalorder %s10, 1
    %p116 = por %p114, %p115
    %p117 = scmp.ne.s32.totalorder %s109, %s112
    %p118 = scmp.eq.s32.totalorder %s10, 0
    %p119 = por %p117, %p118
    %p120 = scmp.ne.s32.totalorder %s109, %s112
    %p121 = scmp.eq.s32.totalorder %s15, 1
    %p122 = por %p120, %p121
    %p123 = scmp.ne.s32.totalorder %s112, %s113
    %p124 = scmp.eq.s32.totalorder %s15, 0
    %p125 = por %p123, %p124
    %p126 = scmp.ne.s32.totalorder %s112, %s113
    %p127 = scmp.eq.s32.totalorder %s16, 1
    %p128 = por %p126, %p127
    %p130 = scmp.ne.s32.totalorder %s113, %s129
    %p131 = scmp.eq.s32.totalorder %s16, 0
    %p132 = por %p130, %p131
    %p133 = scmp.le.s32.totalorder 1, %s10
    %p134 = scmp.lt.s32.totalorder %s10, 3
    %p135 = pnand %p133, %p134
    %p136 = pneg %p135
    // Predicated region
    $region9: #{_unet_conv_block_impl.2} parent=5 // pred_check
      _
    $region10: #{_unet_conv_block_impl.2} parent=5 // pred_check_branch
      %138 = sbr.rel (%p135) target = $region12
    $region11: #{_unet_conv_block_impl.2} parent=5 // pred_region
      %s139 = ssub.s32 %s10, 1
      // Predicated region
      $region13: #{_unet_conv_block_impl.2} parent=11 // pred_check
        %p140 = pneg %p69
      $region14: #{_unet_conv_block_impl.2} parent=11 // pred_check_branch
        %142 = sbr.rel (%p140) target = $region16
      $region15: #{_unet_conv_block_impl.2} parent=11 // pred_region
        _
      $region16: #{_unet_conv_block_impl.2} parent=11 // pred_fallthru
        _
    $region12: #{_unet_conv_block_impl.2} parent=5 // pred_fallthru
      _
    %p143 = scmp.lt.s32.totalorder %s10, 2
    // Predicated region
    $region17: #{_unet_conv_block_impl.2} parent=5 // pred_check
      %p144 = pneg %p143
    $region18: #{_unet_conv_block_impl.2} parent=5 // pred_check_branch
      %146 = sbr.rel (%p144) target = $region20
    $region19: #{_unet_conv_block_impl.2} parent=5 // pred_region
      // Predicated region
      $region21: #{_unet_conv_block_impl.2} parent=19 // pred_check
        %p147 = pneg %p42
      $region22: #{_unet_conv_block_impl.2} parent=19 // pred_check_branch
        %149 = sbr.rel (%p147) target = $region24
      $region23: #{_unet_conv_block_impl.2} parent=19 // pred_region
        %p150 = scmp.lt.s32.totalorder %s17, 1
        %s151 = scalar_select %p150, %s17, 1
        %s152 = smul.addr %s151, 54
        %s153 = smul.addr %s152, 4
        %s154 = scalar_lea.vmem %s0, %s153
      $region24: #{_unet_conv_block_impl.2} parent=19 // pred_fallthru
        _
    $region20: #{_unet_conv_block_impl.2} parent=5 // pred_fallthru
      _
    %p155 = scmp.le.s32.totalorder 1, %s10
    %p156 = scmp.lt.s32.totalorder %s10, 3
    %p157 = pnand %p155, %p156
    %p158 = pneg %p157
    // Predicated region
    $region25: #{_unet_conv_block_impl.2} parent=5 // pred_check
      _
    $region26: #{_unet_conv_block_impl.2} parent=5 // pred_check_branch
      %160 = sbr.rel (%p157) target = $region28
    $region27: #{_unet_conv_block_impl.2} parent=5 // pred_region
      %s161 = ssub.s32 %s10, 1
      %p162 = scmp.lt.s32.totalorder %s19, 1
      %s163 = scalar_select %p162, %s19, 1
      %s164 = smul.addr %s163, 54
      %s165 = smul.addr %s164, 4
      %s166 = scalar_lea.vmem %s0, %s165
      %p167 = pneg %p48
      %p168 = pneg %p45
      %p169 = pneg %p69
      %p170 = pneg %p66
      %p171 = pneg %p97
      %p172 = pneg %p94
      %s173 = smul.u32 16, %s20
      %p174 = scmp.lt.s32.totalorder %s19, 1
      %s175 = scalar_select %p174, %s19, 1
      %p176 = scmp.lt.s32.totalorder %s173, 15
      %s177 = scalar_select %p176, %s173, 15
      %s178 = smul.addr %s177, 2
      %s179 = smul.addr %s175, 32
      %s180 = sadd.s32 %s178, %s179
      %s181 = smul.addr %s180, 4
      %s182 = scalar_lea.vmem %s2, %s181
      %p183 = pneg %p125
      %p184 = pneg %p122
      %p185 = scmp.lt.s32.totalorder %s19, 1
      %s186 = scalar_select %p185, %s19, 1
      %p187 = scmp.lt.s32.totalorder %s20, 0
      %s188 = scalar_select %p187, %s20, 0
      %s189 = sadd.s32 %s188, %s186
      %s190 = smul.addr %s189, 2
      %s191 = scalar_lea.vmem %s3, %s190
      %p192 = scmp.lt.s32.totalorder %s19, 1
      %s193 = scalar_select %p192, %s19, 1
      %s194 = smul.addr %s193, 54
      %s195 = smul.addr %s194, 4
      %s196 = scalar_lea.vmem %s0, %s195
      %s197 = smul.u32 16, %s20
      %p198 = scmp.lt.s32.totalorder %s19, 1
      %s199 = scalar_select %p198, %s19, 1
      %p200 = scmp.lt.s32.totalorder %s197, 15
      %s201 = scalar_select %p200, %s197, 15
      %s202 = smul.addr %s201, 2
      %s203 = smul.addr %s199, 32
      %s204 = sadd.s32 %s202, %s203
      %s205 = smul.addr %s204, 4
      %s206 = scalar_lea.vmem %s2, %s205
      %s207 = smul.u32 16, %s20
      %p208 = scmp.lt.s32.totalorder %s19, 1
      %s209 = scalar_select %p208, %s19, 1
      %p210 = scmp.lt.s32.totalorder %s20, 0
      %s211 = scalar_select %p210, %s20, 0
      %s212 = sadd.s32 %s211, %s209
      %s213 = smul.addr %s212, 2
      %s214 = scalar_lea.vmem %s3, %s213
      %s216 = smul.u32 %s20, 16
      %s217 = smul.u32 %s216, 3
      %s218 = smul.addr %s217, 4
      %s219 = scalar_lea.vmem %s196, %s218
      %v220 = vld [vmem:[%s219] sm:$0xf]
      %v221 = vld [vmem:[%s219 + $0x4] sm:$0xf]
      %v222 = vld [vmem:[%s219 + $0xc] sm:$0xf]
      %v223 = vld [vmem:[%s219 + $0x10] sm:$0xf]
      %v224 = vld [vmem:[%s219 + $0x18] sm:$0xf]
      %v225 = vld [vmem:[%s219 + $0x1c] sm:$0xf]
      %v226 = vld [vmem:[%s219 + $0x24] sm:$0xf]
      %v227 = vld [vmem:[%s219 + $0x28] sm:$0xf]
      %v228 = vld [vmem:[%s219 + $0x30] sm:$0xf]
      %v229 = vld [vmem:[%s219 + $0x34] sm:$0xf]
      %v230 = vld [vmem:[%s219 + $0x3c] sm:$0xf]
      %v231 = vld [vmem:[%s219 + $0x40] sm:$0xf]
      %v232 = vld [vmem:[%s219 + $0x48] sm:$0xf]
      %v233 = vld [vmem:[%s219 + $0x4c] sm:$0xf]
      %v234 = vld [vmem:[%s219 + $0x54] sm:$0xf]
      %v235 = vld [vmem:[%s219 + $0x58] sm:$0xf]
      %v236 = vld [vmem:[%s219 + $0x60] sm:$0xf]
      %v237 = vld [vmem:[%s219 + $0x64] sm:$0xf]
      %v238 = vld [vmem:[%s219 + $0x6c] sm:$0xf]
      %v239 = vld [vmem:[%s219 + $0x70] sm:$0xf]
      %v240 = vld [vmem:[%s219 + $0x78] sm:$0xf]
      %v241 = vld [vmem:[%s219 + $0x7c] sm:$0xf]
      %v242 = vld [vmem:[%s219 + $0x84] sm:$0xf]
      %v243 = vld [vmem:[%s219 + $0x88] sm:$0xf]
      %v244 = vld [vmem:[%s219 + $0x90] sm:$0xf]
      %v245 = vld [vmem:[%s219 + $0x94] sm:$0xf]
      %v246 = vld [vmem:[%s219 + $0x9c] sm:$0xf]
      %v247 = vld [vmem:[%s219 + $0xa0] sm:$0xf]
      %v248 = vld [vmem:[%s219 + $0xa8] sm:$0xf]
      %v249 = vld [vmem:[%s219 + $0xac] sm:$0xf]
      %v250 = vld [vmem:[%s219 + $0xb4] sm:$0xf]
      %v251 = vld [vmem:[%s219 + $0xb8] sm:$0xf]
      %v252 = vld [vmem:[%s219 + $0xc0] sm:$0xf]
      %v253 = vld [vmem:[%s219 + $0xc4] sm:$0xf]
      %v254 = vld [vmem:[%s219 + $0xcc] sm:$0xf]
      %v255 = vld [vmem:[%s219 + $0xd0] sm:$0xf]
      %v256 = vld [vmem:[%s219 + $0x8] sm:$0x1]
      %v257 = vld [vmem:[%s219 + $0x14] sm:$0x1]
      %v258 = vld [vmem:[%s219 + $0x20] sm:$0x1]
      %v259 = vld [vmem:[%s219 + $0x2c] sm:$0x1]
      %v260 = vld [vmem:[%s219 + $0x38] sm:$0x1]
      %v261 = vld [vmem:[%s219 + $0x44] sm:$0x1]
      %v262 = vld [vmem:[%s219 + $0x50] sm:$0x1]
      %v263 = vld [vmem:[%s219 + $0x5c] sm:$0x1]
      %v264 = vld [vmem:[%s219 + $0x68] sm:$0x1]
      %v265 = vld [vmem:[%s219 + $0x74] sm:$0x1]
      %v266 = vld [vmem:[%s219 + $0x80] sm:$0x1]
      %v267 = vld [vmem:[%s219 + $0x8c] sm:$0x1]
      %v268 = vld [vmem:[%s219 + $0x98] sm:$0x1]
      %v269 = vld [vmem:[%s219 + $0xa4] sm:$0x1]
      %v270 = vld [vmem:[%s219 + $0xb0] sm:$0x1]
      %v271 = vld [vmem:[%s219 + $0xbc] sm:$0x1]
      %v272 = vld [vmem:[%s219 + $0xc8] sm:$0x1]
      %v273 = vld [vmem:[%s219 + $0xd4] sm:$0x1]
      %v274 = vld [vmem:[%s219] sm:$0xe]
      %v275 = vld [vmem:[%s219 + $0xc] sm:$0xe]
      %v276 = vld [vmem:[%s219 + $0x18] sm:$0xe]
      %v277 = vld [vmem:[%s219 + $0x24] sm:$0xe]
      %v278 = vld [vmem:[%s219 + $0x30] sm:$0xe]
      %v279 = vld [vmem:[%s219 + $0x3c] sm:$0xe]
      %v280 = vld [vmem:[%s219 + $0x48] sm:$0xe]
      %v281 = vld [vmem:[%s219 + $0x54] sm:$0xe]
      %v282 = vld [vmem:[%s219 + $0x60] sm:$0xe]
      %v283 = vld [vmem:[%s219 + $0x6c] sm:$0xe]
      %v284 = vld [vmem:[%s219 + $0x78] sm:$0xe]
      %v285 = vld [vmem:[%s219 + $0x84] sm:$0xe]
      %v286 = vld [vmem:[%s219 + $0x90] sm:$0xe]
      %v287 = vld [vmem:[%s219 + $0x9c] sm:$0xe]
      %v288 = vld [vmem:[%s219 + $0xa8] sm:$0xe]
      %v289 = vld [vmem:[%s219 + $0xb4] sm:$0xe]
      %v290 = vld [vmem:[%s219 + $0xc0] sm:$0xe]
      %v291 = vld [vmem:[%s219 + $0xcc] sm:$0xe]
      %v328 = vunpack.c.l.b16 %v220
      %v329 = vunpack.c.l.b16 %v221
      %v330 = vunpack.c.l.b16 %v222
      %v331 = vunpack.c.l.b16 %v223
      %v332 = vunpack.c.l.b16 %v224
      %v333 = vunpack.c.l.b16 %v225
      %v334 = vunpack.c.l.b16 %v226
      %v335 = vunpack.c.l.b16 %v227
      %v336 = vunpack.c.l.b16 %v228
      %v337 = vunpack.c.l.b16 %v229
      %v338 = vunpack.c.l.b16 %v230
      %v339 = vunpack.c.l.b16 %v231
      %v340 = vunpack.c.l.b16 %v232
      %v341 = vunpack.c.l.b16 %v233
      %v342 = vunpack.c.l.b16 %v234
      %v343 = vunpack.c.l.b16 %v235
      %v344 = vunpack.c.l.b16 %v236
      %v345 = vunpack.c.l.b16 %v237
      %v346 = vunpack.c.l.b16 %v238
      %v347 = vunpack.c.l.b16 %v239
      %v348 = vunpack.c.l.b16 %v240
      %v349 = vunpack.c.l.b16 %v241
      %v350 = vunpack.c.l.b16 %v242
      %v351 = vunpack.c.l.b16 %v243
      %v352 = vunpack.c.l.b16 %v244
      %v353 = vunpack.c.l.b16 %v245
      %v354 = vunpack.c.l.b16 %v246
      %v355 = vunpack.c.l.b16 %v247
      %v356 = vunpack.c.l.b16 %v248
      %v357 = vunpack.c.l.b16 %v249
      %v358 = vunpack.c.l.b16 %v250
      %v359 = vunpack.c.l.b16 %v251
      %v360 = vunpack.c.l.b16 %v252
      %v361 = vunpack.c.l.b16 %v253
      %v362 = vunpack.c.l.b16 %v254
      %v363 = vunpack.c.l.b16 %v255
      %v364 = vpack.c.b16 %v329, %v328
      %v365 = vpack.c.b16 %v331, %v330
      %v366 = vpack.c.b16 %v333, %v332
      %v367 = vpack.c.b16 %v335, %v334
      %v368 = vpack.c.b16 %v337, %v336
      %v369 = vpack.c.b16 %v339, %v338
      %v370 = vpack.c.b16 %v341, %v340
      %v371 = vpack.c.b16 %v343, %v342
      %v372 = vpack.c.b16 %v345, %v344
      %v373 = vpack.c.b16 %v347, %v346
      %v374 = vpack.c.b16 %v349, %v348
      %v375 = vpack.c.b16 %v351, %v350
      %v376 = vpack.c.b16 %v353, %v352
      %v377 = vpack.c.b16 %v355, %v354
      %v378 = vpack.c.b16 %v357, %v356
      %v379 = vpack.c.b16 %v359, %v358
      %v380 = vpack.c.b16 %v361, %v360
      %v381 = vpack.c.b16 %v363, %v362
      %v400 = vunpack.c.l.b16 %v256
      %v401 = vunpack.c.l.b16 %v257
      %v402 = vunpack.c.l.b16 %v258
      %v403 = vunpack.c.l.b16 %v259
      %v404 = vunpack.c.l.b16 %v260
      %v405 = vunpack.c.l.b16 %v261
      %v406 = vunpack.c.l.b16 %v262
      %v407 = vunpack.c.l.b16 %v263
      %v408 = vunpack.c.l.b16 %v264
      %v409 = vunpack.c.l.b16 %v265
      %v410 = vunpack.c.l.b16 %v266
      %v411 = vunpack.c.l.b16 %v267
      %v412 = vunpack.c.l.b16 %v268
      %v413 = vunpack.c.l.b16 %v269
      %v414 = vunpack.c.l.b16 %v270
      %v415 = vunpack.c.l.b16 %v271
      %v416 = vunpack.c.l.b16 %v272
      %v417 = vunpack.c.l.b16 %v273
      %v418 = vpack.c.b16 %v400, %v400
      %v419 = vpack.c.b16 %v401, %v401
      %v420 = vpack.c.b16 %v402, %v402
      %v421 = vpack.c.b16 %v403, %v403
      %v422 = vpack.c.b16 %v404, %v404
      %v423 = vpack.c.b16 %v405, %v405
      %v424 = vpack.c.b16 %v406, %v406
      %v425 = vpack.c.b16 %v407, %v407
      %v426 = vpack.c.b16 %v408, %v408
      %v427 = vpack.c.b16 %v409, %v409
      %v428 = vpack.c.b16 %v410, %v410
      %v429 = vpack.c.b16 %v411, %v411
      %v430 = vpack.c.b16 %v412, %v412
      %v431 = vpack.c.b16 %v413, %v413
      %v432 = vpack.c.b16 %v414, %v414
      %v433 = vpack.c.b16 %v415, %v415
      %v434 = vpack.c.b16 %v416, %v416
      %v435 = vpack.c.b16 %v417, %v417
      %vm436 = vsmask.f32 7424
      %v438 = vshrl.u32 %v364, 16
      %v440 = vshll.u32 %v364, 16
      %v442 = vrot.slane %v440, 1
      %v443 = vor.u32 %v438, %v442
      %v445 = vshll.u32 %v418, 16
      %v447 = vrot.slane %v445, 1
      %v448 = vsel %vm436, %v443, %v447
      %v450 = vshrl.u32 %v365, 16
      %v452 = vshll.u32 %v365, 16
      %v454 = vrot.slane %v452, 1
      %v455 = vor.u32 %v450, %v454
      %v457 = vshll.u32 %v419, 16
      %v459 = vrot.slane %v457, 1
      %v460 = vsel %vm436, %v455, %v459
      %v462 = vshrl.u32 %v366, 16
      %v464 = vshll.u32 %v366, 16
      %v466 = vrot.slane %v464, 1
      %v467 = vor.u32 %v462, %v466
      %v469 = vshll.u32 %v420, 16
      %v471 = vrot.slane %v469, 1
      %v472 = vsel %vm436, %v467, %v471
      %v474 = vshrl.u32 %v367, 16
      %v476 = vshll.u32 %v367, 16
      %v478 = vrot.slane %v476, 1
      %v479 = vor.u32 %v474, %v478
      %v481 = vshll.u32 %v421, 16
      %v483 = vrot.slane %v481, 1
      %v484 = vsel %vm436, %v479, %v483
      %v486 = vshrl.u32 %v368, 16
      %v488 = vshll.u32 %v368, 16
      %v490 = vrot.slane %v488, 1
      %v491 = vor.u32 %v486, %v490
      %v493 = vshll.u32 %v422, 16
      %v495 = vrot.slane %v493, 1
      %v496 = vsel %vm436, %v491, %v495
      %v498 = vshrl.u32 %v369, 16
      %v500 = vshll.u32 %v369, 16
      %v502 = vrot.slane %v500, 1
      %v503 = vor.u32 %v498, %v502
      %v505 = vshll.u32 %v423, 16
      %v507 = vrot.slane %v505, 1
      %v508 = vsel %vm436, %v503, %v507
      %v510 = vshrl.u32 %v370, 16
      %v512 = vshll.u32 %v370, 16
      %v514 = vrot.slane %v512, 1
      %v515 = vor.u32 %v510, %v514
      %v517 = vshll.u32 %v424, 16
      %v519 = vrot.slane %v517, 1
      %v520 = vsel %vm436, %v515, %v519
      %v522 = vshrl.u32 %v371, 16
      %v524 = vshll.u32 %v371, 16
      %v526 = vrot.slane %v524, 1
      %v527 = vor.u32 %v522, %v526
      %v529 = vshll.u32 %v425, 16
      %v531 = vrot.slane %v529, 1
      %v532 = vsel %vm436, %v527, %v531
      %v534 = vshrl.u32 %v372, 16
      %v536 = vshll.u32 %v372, 16
      %v538 = vrot.slane %v536, 1
      %v539 = vor.u32 %v534, %v538
      %v541 = vshll.u32 %v426, 16
      %v543 = vrot.slane %v541, 1
      %v544 = vsel %vm436, %v539, %v543
      %v546 = vshrl.u32 %v373, 16
      %v548 = vshll.u32 %v373, 16
      %v550 = vrot.slane %v548, 1
      %v551 = vor.u32 %v546, %v550
      %v553 = vshll.u32 %v427, 16
      %v555 = vrot.slane %v553, 1
      %v556 = vsel %vm436, %v551, %v555
      %v558 = vshrl.u32 %v374, 16
      %v560 = vshll.u32 %v374, 16
      %v562 = vrot.slane %v560, 1
      %v563 = vor.u32 %v558, %v562
      %v565 = vshll.u32 %v428, 16
      %v567 = vrot.slane %v565, 1
      %v568 = vsel %vm436, %v563, %v567
      %v570 = vshrl.u32 %v375, 16
      %v572 = vshll.u32 %v375, 16
      %v574 = vrot.slane %v572, 1
      %v575 = vor.u32 %v570, %v574
      %v577 = vshll.u32 %v429, 16
      %v579 = vrot.slane %v577, 1
      %v580 = vsel %vm436, %v575, %v579
      %v582 = vshrl.u32 %v376, 16
      %v584 = vshll.u32 %v376, 16
      %v586 = vrot.slane %v584, 1
      %v587 = vor.u32 %v582, %v586
      %v589 = vshll.u32 %v430, 16
      %v591 = vrot.slane %v589, 1
      %v592 = vsel %vm436, %v587, %v591
      %v594 = vshrl.u32 %v377, 16
      %v596 = vshll.u32 %v377, 16
      %v598 = vrot.slane %v596, 1
      %v599 = vor.u32 %v594, %v598
      %v601 = vshll.u32 %v431, 16
      %v603 = vrot.slane %v601, 1
      %v604 = vsel %vm436, %v599, %v603
      %v606 = vshrl.u32 %v378, 16
      %v608 = vshll.u32 %v378, 16
      %v610 = vrot.slane %v608, 1
      %v611 = vor.u32 %v606, %v610
      %v613 = vshll.u32 %v432, 16
      %v615 = vrot.slane %v613, 1
      %v616 = vsel %vm436, %v611, %v615
      %v618 = vshrl.u32 %v379, 16
      %v620 = vshll.u32 %v379, 16
      %v622 = vrot.slane %v620, 1
      %v623 = vor.u32 %v618, %v622
      %v625 = vshll.u32 %v433, 16
      %v627 = vrot.slane %v625, 1
      %v628 = vsel %vm436, %v623, %v627
      %v630 = vshrl.u32 %v380, 16
      %v632 = vshll.u32 %v380, 16
      %v634 = vrot.slane %v632, 1
      %v635 = vor.u32 %v630, %v634
      %v637 = vshll.u32 %v434, 16
      %v639 = vrot.slane %v637, 1
      %v640 = vsel %vm436, %v635, %v639
      %v642 = vshrl.u32 %v381, 16
      %v644 = vshll.u32 %v381, 16
      %v646 = vrot.slane %v644, 1
      %v647 = vor.u32 %v642, %v646
      %v649 = vshll.u32 %v435, 16
      %v651 = vrot.slane %v649, 1
      %v652 = vsel %vm436, %v647, %v651
      %653 = vrot.lane.b32.xlu0 %v448, 4
      %v654 = vpop.permute.xlu0 %653
      %655 = vrot.lane.b32.xlu0 %v460, 4
      %v656 = vpop.permute.xlu0 %655
      %657 = vrot.lane.b32.xlu0 %v472, 4
      %v658 = vpop.permute.xlu0 %657
      %659 = vrot.lane.b32.xlu0 %v484, 4
      %v660 = vpop.permute.xlu0 %659
      %661 = vrot.lane.b32.xlu0 %v496, 4
      %v662 = vpop.permute.xlu0 %661
      %663 = vrot.lane.b32.xlu0 %v508, 4
      %v664 = vpop.permute.xlu0 %663
      %665 = vrot.lane.b32.xlu0 %v520, 4
      %v666 = vpop.permute.xlu0 %665
      %667 = vrot.lane.b32.xlu0 %v532, 4
      %v668 = vpop.permute.xlu0 %667
      %669 = vrot.lane.b32.xlu0 %v544, 4
      %v670 = vpop.permute.xlu0 %669
      %671 = vrot.lane.b32.xlu0 %v556, 4
      %v672 = vpop.permute.xlu0 %671
      %673 = vrot.lane.b32.xlu0 %v568, 4
      %v674 = vpop.permute.xlu0 %673
      %675 = vrot.lane.b32.xlu0 %v580, 4
      %v676 = vpop.permute.xlu0 %675
      %677 = vrot.lane.b32.xlu0 %v592, 4
      %v678 = vpop.permute.xlu0 %677
      %679 = vrot.lane.b32.xlu0 %v604, 4
      %v680 = vpop.permute.xlu0 %679
      %681 = vrot.lane.b32.xlu0 %v616, 4
      %v682 = vpop.permute.xlu0 %681
      %683 = vrot.lane.b32.xlu0 %v628, 4
      %v684 = vpop.permute.xlu0 %683
      %685 = vrot.lane.b32.xlu0 %v640, 4
      %v686 = vpop.permute.xlu0 %685
      %687 = vrot.lane.b32.xlu0 %v652, 4
      %v688 = vpop.permute.xlu0 %687
      %v707 = vunpack.c.l.b16 %v274
      %v708 = vunpack.c.l.b16 %v275
      %v709 = vunpack.c.l.b16 %v276
      %v710 = vunpack.c.l.b16 %v277
      %v711 = vunpack.c.l.b16 %v278
      %v712 = vunpack.c.l.b16 %v279
      %v713 = vunpack.c.l.b16 %v280
      %v714 = vunpack.c.l.b16 %v281
      %v715 = vunpack.c.l.b16 %v282
      %v716 = vunpack.c.l.b16 %v283
      %v717 = vunpack.c.l.b16 %v284
      %v718 = vunpack.c.l.b16 %v285
      %v719 = vunpack.c.l.b16 %v286
      %v720 = vunpack.c.l.b16 %v287
      %v721 = vunpack.c.l.b16 %v288
      %v722 = vunpack.c.l.b16 %v289
      %v723 = vunpack.c.l.b16 %v290
      %v724 = vunpack.c.l.b16 %v291
      %v725 = vpack.c.b16 %v329, %v707
      %v726 = vpack.c.b16 %v331, %v708
      %v727 = vpack.c.b16 %v333, %v709
      %v728 = vpack.c.b16 %v335, %v710
      %v729 = vpack.c.b16 %v337, %v711
      %v730 = vpack.c.b16 %v339, %v712
      %v731 = vpack.c.b16 %v341, %v713
      %v732 = vpack.c.b16 %v343, %v714
      %v733 = vpack.c.b16 %v345, %v715
      %v734 = vpack.c.b16 %v347, %v716
      %v735 = vpack.c.b16 %v349, %v717
      %v736 = vpack.c.b16 %v351, %v718
      %v737 = vpack.c.b16 %v353, %v719
      %v738 = vpack.c.b16 %v355, %v720
      %v739 = vpack.c.b16 %v357, %v721
      %v740 = vpack.c.b16 %v359, %v722
      %v741 = vpack.c.b16 %v361, %v723
      %v742 = vpack.c.b16 %v363, %v724
      %vm743 = vcmask 1046528
      %v744 = vrot.slane %v725, 1
      %v745 = vrot.slane %v418, 1
      %v746 = vsel %vm743, %v744, %v745
      %v747 = vrot.slane %v726, 1
      %v748 = vrot.slane %v419, 1
      %v749 = vsel %vm743, %v747, %v748
      %v750 = vrot.slane %v727, 1
      %v751 = vrot.slane %v420, 1
      %v752 = vsel %vm743, %v750, %v751
      %v753 = vrot.slane %v728, 1
      %v754 = vrot.slane %v421, 1
      %v755 = vsel %vm743, %v753, %v754
      %v756 = vrot.slane %v729, 1
      %v757 = vrot.slane %v422, 1
      %v758 = vsel %vm743, %v756, %v757
      %v759 = vrot.slane %v730, 1
      %v760 = vrot.slane %v423, 1
      %v761 = vsel %vm743, %v759, %v760
      %v762 = vrot.slane %v731, 1
      %v763 = vrot.slane %v424, 1
      %v764 = vsel %vm743, %v762, %v763
      %v765 = vrot.slane %v732, 1
      %v766 = vrot.slane %v425, 1
      %v767 = vsel %vm743, %v765, %v766
      %v768 = vrot.slane %v733, 1
      %v769 = vrot.slane %v426, 1
      %v770 = vsel %vm743, %v768, %v769
      %v771 = vrot.slane %v734, 1
      %v772 = vrot.slane %v427, 1
      %v773 = vsel %vm743, %v771, %v772
      %v774 = vrot.slane %v735, 1
      %v775 = vrot.slane %v428, 1
      %v776 = vsel %vm743, %v774, %v775
      %v777 = vrot.slane %v736, 1
      %v778 = vrot.slane %v429, 1
      %v779 = vsel %vm743, %v777, %v778
      %v780 = vrot.slane %v737, 1
      %v781 = vrot.slane %v430, 1
      %v782 = vsel %vm743, %v780, %v781
      %v783 = vrot.slane %v738, 1
      %v784 = vrot.slane %v431, 1
      %v785 = vsel %vm743, %v783, %v784
      %v786 = vrot.slane %v739, 1
      %v787 = vrot.slane %v432, 1
      %v788 = vsel %vm743, %v786, %v787
      %v789 = vrot.slane %v740, 1
      %v790 = vrot.slane %v433, 1
      %v791 = vsel %vm743, %v789, %v790
      %v792 = vrot.slane %v741, 1
      %v793 = vrot.slane %v434, 1
      %v794 = vsel %vm743, %v792, %v793
      %v795 = vrot.slane %v742, 1
      %v796 = vrot.slane %v435, 1
      %v797 = vsel %vm743, %v795, %v796
      %798 = vrot.lane.b32.xlu0 %v746, 8
      %v799 = vpop.permute.xlu0 %798
      %800 = vrot.lane.b32.xlu0 %v749, 8
      %v801 = vpop.permute.xlu0 %800
      %802 = vrot.lane.b32.xlu0 %v752, 8
      %v803 = vpop.permute.xlu0 %802
      %804 = vrot.lane.b32.xlu0 %v755, 8
      %v805 = vpop.permute.xlu0 %804
      %806 = vrot.lane.b32.xlu0 %v758, 8
      %v807 = vpop.permute.xlu0 %806
      %808 = vrot.lane.b32.xlu0 %v761, 8
      %v809 = vpop.permute.xlu0 %808
      %810 = vrot.lane.b32.xlu0 %v764, 8
      %v811 = vpop.permute.xlu0 %810
      %812 = vrot.lane.b32.xlu0 %v767, 8
      %v813 = vpop.permute.xlu0 %812
      %814 = vrot.lane.b32.xlu0 %v770, 8
      %v815 = vpop.permute.xlu0 %814
      %816 = vrot.lane.b32.xlu0 %v773, 8
      %v817 = vpop.permute.xlu0 %816
      %818 = vrot.lane.b32.xlu0 %v776, 8
      %v819 = vpop.permute.xlu0 %818
      %820 = vrot.lane.b32.xlu0 %v779, 8
      %v821 = vpop.permute.xlu0 %820
      %822 = vrot.lane.b32.xlu0 %v782, 8
      %v823 = vpop.permute.xlu0 %822
      %824 = vrot.lane.b32.xlu0 %v785, 8
      %v825 = vpop.permute.xlu0 %824
      %826 = vrot.lane.b32.xlu0 %v788, 8
      %v827 = vpop.permute.xlu0 %826
      %828 = vrot.lane.b32.xlu0 %v791, 8
      %v829 = vpop.permute.xlu0 %828
      %830 = vrot.lane.b32.xlu0 %v794, 8
      %v831 = vpop.permute.xlu0 %830
      %832 = vrot.lane.b32.xlu0 %v797, 8
      %v833 = vpop.permute.xlu0 %832
      %vm834 = vcmask 31744
      %v836 = vsel %vm834, %v364, %v654
      %v838 = vsel %vm834, %v365, %v656
      %v840 = vsel %vm834, %v366, %v658
      %v842 = vsel %vm834, %v367, %v660
      %v844 = vsel %vm834, %v368, %v662
      %v846 = vsel %vm834, %v369, %v664
      %v848 = vsel %vm834, %v370, %v666
      %v850 = vsel %vm834, %v371, %v668
      %v852 = vsel %vm834, %v372, %v670
      %v854 = vsel %vm834, %v373, %v672
      %v856 = vsel %vm834, %v374, %v674
      %v858 = vsel %vm834, %v375, %v676
      %v860 = vsel %vm834, %v376, %v678
      %v862 = vsel %vm834, %v377, %v680
      %v864 = vsel %vm834, %v378, %v682
      %v866 = vsel %vm834, %v379, %v684
      %v868 = vsel %vm834, %v380, %v686
      %v870 = vsel %vm834, %v381, %v688
      %vm871 = vcmask 64512
      %v873 = vsel %vm871, %v836, %v799
      %v875 = vsel %vm871, %v838, %v801
      %v877 = vsel %vm871, %v840, %v803
      %v879 = vsel %vm871, %v842, %v805
      %v881 = vsel %vm871, %v844, %v807
      %v883 = vsel %vm871, %v846, %v809
      %v885 = vsel %vm871, %v848, %v811
      %v887 = vsel %vm871, %v850, %v813
      %v889 = vsel %vm871, %v852, %v815
      %v891 = vsel %vm871, %v854, %v817
      %v893 = vsel %vm871, %v856, %v819
      %v895 = vsel %vm871, %v858, %v821
      %v897 = vsel %vm871, %v860, %v823
      %v899 = vsel %vm871, %v862, %v825
      %v901 = vsel %vm871, %v864, %v827
      %v903 = vsel %vm871, %v866, %v829
      %v905 = vsel %vm871, %v868, %v831
      %v907 = vsel %vm871, %v870, %v833
      %v908 = vld [vmem:[%s1] sm:$0xf]
      %v909 = vld [vmem:[%s1 + $0x4] sm:$0x3]
      %v912 = vunpack.c.l.b16 %v908
      %v913 = vunpack.c.l.b16 %v909
      %v914 = vpack.c.b16 %v913, %v912
      %vm915 = vcmask 97280
      %v916 = vsel %vm915, %v873, 0
      %v918 = vsel %vm915, %v875, 0
      %v920 = vsel %vm915, %v877, 0
      %v922 = vsel %vm915, %v879, 0
      %v924 = vsel %vm915, %v881, 0
      %v926 = vsel %vm915, %v883, 0
      %v928 = vsel %vm915, %v885, 0
      %v930 = vsel %vm915, %v887, 0
      %v932 = vsel %vm915, %v889, 0
      %v934 = vsel %vm915, %v891, 0
      %v936 = vsel %vm915, %v893, 0
      %v938 = vsel %vm915, %v895, 0
      %v940 = vsel %vm915, %v897, 0
      %v942 = vsel %vm915, %v899, 0
      %v944 = vsel %vm915, %v901, 0
      %v946 = vsel %vm915, %v903, 0
      %vm948 = vcmask 1045504
      %v950 = vsel %vm948, %v914, 0
      %952 = vmatprep.subr.bf16.mxu0 0
      %953 = vmatpush1.bf16.msra.mxu0 %v950
      %954 = vmatprep.subr.bf16.mxu0 0
      %955 = vmatpush1.bf16.msra.mxu0 0
      %956 = vmatprep.subr.bf16.mxu0 0
      %957 = vmatpush1.bf16.msra.mxu0 0
      %958 = vmatprep.subr.bf16.mxu0 0
      %959 = vmatpush1.bf16.msra.mxu0 0
      %960 = vmatprep.subr.bf16.mxu0 0
      %961 = vmatpush1.bf16.msra.mxu0 0
      %962 = vmatprep.subr.bf16.mxu0 0
      %963 = vmatpush1.bf16.msra.mxu0 0
      %964 = vmatprep.subr.bf16.mxu0 0
      %965 = vmatpush1.bf16.msra.mxu0 0
      %966 = vmatprep.subr.bf16.mxu0 0
      %967 = vmatpush1.bf16.msra.mxu0 0
      %968 = vmatprep.subr.bf16.mxu0 0
      %969 = vmatpush1.bf16.msra.mxu0 0
      %970 = vmatprep.subr.bf16.mxu0 0
      %971 = vmatpush1.bf16.msra.mxu0 0
      %972 = vmatprep.subr.bf16.mxu0 0
      %973 = vmatpush1.bf16.msra.mxu0 0
      %974 = vmatprep.subr.bf16.mxu0 0
      %975 = vmatpush1.bf16.msra.mxu0 0
      %976 = vmatprep.subr.bf16.mxu0 0
      %977 = vmatpush1.bf16.msra.mxu0 0
      %978 = vmatprep.subr.bf16.mxu0 0
      %979 = vmatpush1.bf16.msra.mxu0 0
      %980 = vmatprep.subr.bf16.mxu0 0
      %981 = vmatpush1.bf16.msra.mxu0 0
      %982 = vmatprep.subr.bf16.mxu0 0
      %983 = vmatpush1.bf16.msra.mxu0 0
      %984 = vmatprep.mubr.bf16.mxu0 0
      %985 = vmatmul.mubr.bf16.gmra.mrb[0].mxu0 %v916
      %v986 = vpop.f32.mrb[0].mxu0
      %v987 = vadd.f32 0.0, %v986
      %v988 = vpop.f32.mrb[0].mxu0
      %v989 = vpop.f32.mrb[0].mxu0
      %v990 = vadd.f32 0.0, %v989
      %v991 = vpop.f32.mrb[0].mxu0
      %992 = vmatprep.mubr.bf16.mxu0 0
      %993 = vmatmul.mubr.bf16.gmra.mrb[0].mxu0 %v918
      %v994 = vpop.f32.mrb[0].mxu0
      %v995 = vadd.f32 0.0, %v994
      %v996 = vpop.f32.mrb[0].mxu0
      %v997 = vpop.f32.mrb[0].mxu0
      %v998 = vadd.f32 0.0, %v997
      %v999 = vpop.f32.mrb[0].mxu0
      %1000 = vmatprep.mubr.bf16.mxu0 0
      %1001 = vmatmul.mubr.bf16.gmra.mrb[0].mxu0 %v920
      %v1002 = vpop.f32.mrb[0].mxu0
      %v1003 = vadd.f32 0.0, %v1002
      %v1004 = vpop.f32.mrb[0].mxu0
      %v1005 = vpop.f32.mrb[0].mxu0
      %v1006 = vadd.f32 0.0, %v1005
      %v1007 = vpop.f32.mrb[0].mxu0
      %1008 = vmatprep.mubr.bf16.mxu0 0
      %1009 = vmatmul.mubr.bf16.gmra.mrb[0].mxu0 %v922
      %v1010 = vpop.f32.mrb[0].mxu0
      %v1011 = vadd.f32 0.0, %v1010
      %v1012 = vpop.f32.mrb[0].mxu0
      %v1013 = vpop.f32.mrb[0].mxu0
      %v1014 = vadd.f32 0.0, %v1013
      %v1015 = vpop.f32.mrb[0].mxu0
      %1016 = vmatprep.mubr.bf16.mxu0 0
      %1017 = vmatmul.mubr.bf16.gmra.mrb[0].mxu0 %v924
      %v1018 = vpop.f32.mrb[0].mxu0
      %v1019 = vadd.f32 0.0, %v1018
      %v1020 = vpop.f32.mrb[0].mxu0
      %v1021 = vpop.f32.mrb[0].mxu0
      %v1022 = vadd.f32 0.0, %v1021
      %v1023 = vpop.f32.mrb[0].mxu0
      %1024 = vmatprep.mubr.bf16.mxu0 0
      %1025 = vmatmul.mubr.bf16.gmra.mrb[0].mxu0 %v926
      %v1026 = vpop.f32.mrb[0].mxu0
      %v1027 = vadd.f32 0.0, %v1026
      %v1028 = vpop.f32.mrb[0].mxu0
      %v1029 = vpop.f32.mrb[0].mxu0
      %v1030 = vadd.f32 0.0, %v1029
      %v1031 = vpop.f32.mrb[0].mxu0
      %1032 = vmatprep.mubr.bf16.mxu0 0
      %1033 = vmatmul.mubr.bf16.gmra.mrb[0].mxu0 %v928
      %v1034 = vpop.f32.mrb[0].mxu0
      %v1035 = vadd.f32 0.0, %v1034
      %v1036 = vpop.f32.mrb[0].mxu0
      %v1037 = vpop.f32.mrb[0].mxu0
      %v1038 = vadd.f32 0.0, %v1037
      %v1039 = vpop.f32.mrb[0].mxu0
      %1040 = vmatprep.mubr.bf16.mxu0 0
      %1041 = vmatmul.mubr.bf16.gmra.mrb[0].mxu0 %v930
      %v1042 = vpop.f32.mrb[0].mxu0
      %v1043 = vadd.f32 0.0, %v1042
      %v1044 = vpop.f32.mrb[0].mxu0
      %v1045 = vpop.f32.mrb[0].mxu0
      %v1046 = vadd.f32 0.0, %v1045
      %v1047 = vpop.f32.mrb[0].mxu0
      %1048 = vmatprep.mubr.bf16.mxu0 0
      %1049 = vmatmul.mubr.bf16.gmra.mrb[0].mxu0 %v932
      %v1050 = vpop.f32.mrb[0].mxu0
      %v1051 = vadd.f32 0.0, %v1050
      %v1052 = vpop.f32.mrb[0].mxu0
      %v1053 = vpop.f32.mrb[0].mxu0
      %v1054 = vadd.f32 0.0, %v1053
      %v1055 = vpop.f32.mrb[0].mxu0
      %1056 = vmatprep.mubr.bf16.mxu0 0
      %1057 = vmatmul.mubr.bf16.gmra.mrb[0].mxu0 %v934
      %v1058 = vpop.f32.mrb[0].mxu0
      %v1059 = vadd.f32 0.0, %v1058
      %v1060 = vpop.f32.mrb[0].mxu0
      %v1061 = vpop.f32.mrb[0].mxu0
      %v1062 = vadd.f32 0.0, %v1061
      %v1063 = vpop.f32.mrb[0].mxu0
      %1064 = vmatprep.mubr.bf16.mxu0 0
      %1065 = vmatmul.mubr.bf16.gmra.mrb[0].mxu0 %v936
      %v1066 = vpop.f32.mrb[0].mxu0
      %v1067 = vadd.f32 0.0, %v1066
      %v1068 = vpop.f32.mrb[0].mxu0
      %v1069 = vpop.f32.mrb[0].mxu0
      %v1070 = vadd.f32 0.0, %v1069
      %v1071 = vpop.f32.mrb[0].mxu0
      %1072 = vmatprep.mubr.bf16.mxu0 0
      %1073 = vmatmul.mubr.bf16.gmra.mrb[0].mxu0 %v938
      %v1074 = vpop.f32.mrb[0].mxu0
      %v1075 = vadd.f32 0.0, %v1074
      %v1076 = vpop.f32.mrb[0].mxu0
      %v1077 = vpop.f32.mrb[0].mxu0
      %v1078 = vadd.f32 0.0, %v1077
      %v1079 = vpop.f32.mrb[0].mxu0
      %1080 = vmatprep.mubr.bf16.mxu0 0
      %1081 = vmatmul.mubr.bf16.gmra.mrb[0].mxu0 %v940
      %v1082 = vpop.f32.mrb[0].mxu0
      %v1083 = vadd.f32 0.0, %v1082
      %v1084 = vpop.f32.mrb[0].mxu0
      %v1085 = vpop.f32.mrb[0].mxu0
      %v1086 = vadd.f32 0.0, %v1085
      %v1087 = vpop.f32.mrb[0].mxu0
      %1088 = vmatprep.mubr.bf16.mxu0 0
      %1089 = vmatmul.mubr.bf16.gmra.mrb[0].mxu0 %v942
      %v1090 = vpop.f32.mrb[0].mxu0
      %v1091 = vadd.f32 0.0, %v1090
      %v1092 = vpop.f32.mrb[0].mxu0
      %v1093 = vpop.f32.mrb[0].mxu0
      %v1094 = vadd.f32 0.0, %v1093
      %v1095 = vpop.f32.mrb[0].mxu0
      %1096 = vmatprep.mubr.bf16.mxu0 0
      %1097 = vmatmul.mubr.bf16.gmra.mrb[0].mxu0 %v944
      %v1098 = vpop.f32.mrb[0].mxu0
      %v1099 = vadd.f32 0.0, %v1098
      %v1100 = vpop.f32.mrb[0].mxu0
      %v1101 = vpop.f32.mrb[0].mxu0
      %v1102 = vadd.f32 0.0, %v1101
      %v1103 = vpop.f32.mrb[0].mxu0
      %1104 = vmatprep.mubr.bf16.mxu0 0
      %1105 = vmatmul.mubr.bf16.gmra.mrb[0].mxu0 %v946
      %v1106 = vpop.f32.mrb[0].mxu0
      %v1107 = vadd.f32 0.0, %v1106
      %v1108 = vpop.f32.mrb[0].mxu0
      %v1109 = vpop.f32.mrb[0].mxu0
      %v1110 = vadd.f32 0.0, %v1109
      %v1111 = vpop.f32.mrb[0].mxu0
      %1112 = vdwg.mxu0
      %1113 = vst [vmem:[#allocation2] sm:$0xff] %v987
      %1114 = vst [vmem:[#allocation2 + $0x8] sm:$0xff] %v990
      %1115 = vst [vmem:[#allocation2 + $0x10] sm:$0xff] %v995
      %1116 = vst [vmem:[#allocation2 + $0x18] sm:$0xff] %v998
      %1117 = vst [vmem:[#allocation2 + $0x20] sm:$0xff] %v1003
      %1118 = vst [vmem:[#allocation2 + $0x28] sm:$0xff] %v1006
      %1119 = vst [vmem:[#allocation2 + $0x30] sm:$0xff] %v1011
      %1120 = vst [vmem:[#allocation2 + $0x38] sm:$0xff] %v1014
      %1121 = vst [vmem:[#allocation2 + $0x40] sm:$0xff] %v1019
      %1122 = vst [vmem:[#allocation2 + $0x48] sm:$0xff] %v1022
      %1123 = vst [vmem:[#allocation2 + $0x50] sm:$0xff] %v1027
      %1124 = vst [vmem:[#allocation2 + $0x58] sm:$0xff] %v1030
      %1125 = vst [vmem:[#allocation2 + $0x60] sm:$0xff] %v1035
      %1126 = vst [vmem:[#allocation2 + $0x68] sm:$0xff] %v1038
      %1127 = vst [vmem:[#allocation2 + $0x70] sm:$0xff] %v1043
      %1128 = vst [vmem:[#allocation2 + $0x78] sm:$0xff] %v1046
      %1129 = vst [vmem:[#allocation2 + $0x80] sm:$0xff] %v1051
      %1130 = vst [vmem:[#allocation2 + $0x88] sm:$0xff] %v1054
      %1131 = vst [vmem:[#allocation2 + $0x90] sm:$0xff] %v1059
      %1132 = vst [vmem:[#allocation2 + $0x98] sm:$0xff] %v1062
      %1133 = vst [vmem:[#allocation2 + $0xa0] sm:$0xff] %v1067
      %1134 = vst [vmem:[#allocation2 + $0xa8] sm:$0xff] %v1070
      %1135 = vst [vmem:[#allocation2 + $0xb0] sm:$0xff] %v1075
      %1136 = vst [vmem:[#allocation2 + $0xb8] sm:$0xff] %v1078
      %1137 = vst [vmem:[#allocation2 + $0xc0] sm:$0xff] %v1083
      %1138 = vst [vmem:[#allocation2 + $0xc8] sm:$0xff] %v1086
      %1139 = vst [vmem:[#allocation2 + $0xd0] sm:$0xff] %v1091
      %1140 = vst [vmem:[#allocation2 + $0xd8] sm:$0xff] %v1094
      %1141 = vst [vmem:[#allocation2 + $0xe0] sm:$0xff] %v1099
      %1142 = vst [vmem:[#allocation2 + $0xe8] sm:$0xff] %v1102
      %1143 = vst [vmem:[#allocation2 + $0xf0] sm:$0xff] %v1107
      %1144 = vst [vmem:[#allocation2 + $0xf8] sm:$0xff] %v1110
      %s1145 = scalar_lea.vmem %s1, 8
      %v1146 = vld [vmem:[%s1145] sm:$0xf]
      %v1147 = vld [vmem:[%s1145 + $0x4] sm:$0x3]
      %v1150 = vunpack.c.l.b16 %v1146
      %v1151 = vunpack.c.l.b16 %v1147
      %v1152 = vpack.c.b16 %v1151, %v1150
      %v1153 = vsel %vm915, %v905, 0
      %v1156 = vsel %vm948, %v1152, 0
      %1158 = vmatprep.subr.bf16.mxu0 0
      %1159 = vmatpush1.bf16.msra.mxu0 %v1156
      %1160 = vmatprep.subr.bf16.mxu0 0
      %1161 = vmatpush1.bf16.msra.mxu0 0
      %1162 = vmatprep.subr.bf16.mxu0 0
      %1163 = vmatpush1.bf16.msra.mxu0 0
      %1164 = vmatprep.subr.bf16.mxu0 0
      %1165 = vmatpush1.bf16.msra.mxu0 0
      %1166 = vmatprep.subr.bf16.mxu0 0
      %1167 = vmatpush1.bf16.msra.mxu0 0
      %1168 = vmatprep.subr.bf16.mxu0 0
      %1169 = vmatpush1.bf16.msra.mxu0 0
      %1170 = vmatprep.subr.bf16.mxu0 0
      %1171 = vmatpush1.bf16.msra.mxu0 0
      %1172 = vmatprep.subr.bf16.mxu0 0
      %1173 = vmatpush1.bf16.msra.mxu0 0
      %1174 = vmatprep.subr.bf16.mxu0 0
      %1175 = vmatpush1.bf16.msra.mxu0 0
      %1176 = vmatprep.subr.bf16.mxu0 0
      %1177 = vmatpush1.bf16.msra.mxu0 0
      %1178 = vmatprep.subr.bf16.mxu0 0
      %1179 = vmatpush1.bf16.msra.mxu0 0
      %1180 = vmatprep.subr.bf16.mxu0 0
      %1181 = vmatpush1.bf16.msra.mxu0 0
      %1182 = vmatprep.subr.bf16.mxu0 0
      %1183 = vmatpush1.bf16.msra.mxu0 0
      %1184 = vmatprep.subr.bf16.mxu0 0
      %1185 = vmatpush1.bf16.msra.mxu0 0
      %1186 = vmatprep.subr.bf16.mxu0 0
      %1187 = vmatpush1.bf16.msra.mxu0 0
      %1188 = vmatprep.subr.bf16.mxu0 0
      %1189 = vmatpush1.bf16.msra.mxu0 0
      %1190 = vmatprep.mubr.bf16.mxu0 0
      %1191 = vmatmul.mubr.bf16.gmra.mrb[0].mxu0 %v918
      %v1192 = vpop.f32.mrb[0].mxu0
      %v1193 = vadd.f32 0.0, %v1192
      %v1194 = vpop.f32.mrb[0].mxu0
      %v1195 = vpop.f32.mrb[0].mxu0
      %v1196 = vadd.f32 0.0, %v1195
      %v1197 = vpop.f32.mrb[0].mxu0
      %1198 = vmatprep.mubr.bf16.mxu0 0
      %1199 = vmatmul.mubr.bf16.gmra.mrb[0].mxu0 %v920
      %v1200 = vpop.f32.mrb[0].mxu0
      %v1201 = vadd.f32 0.0, %v1200
      %v1202 = vpop.f32.mrb[0].mxu0
      %v1203 = vpop.f32.mrb[0].mxu0
      %v1204 = vadd.f32 0.0, %v1203
      %v1205 = vpop.f32.mrb[0].mxu0
      %1206 = vmatprep.mubr.bf16.mxu0 0
      %1207 = vmatmul.mubr.bf16.gmra.mrb[0].mxu0 %v922
      %v1208 = vpop.f32.mrb[0].mxu0
      %v1209 = vadd.f32 0.0, %v1208
      %v1210 = vpop.f32.mrb[0].mxu0
      %v1211 = vpop.f32.mrb[0].mxu0
      %v1212 = vadd.f32 0.0, %v1211
      %v1213 = vpop.f32.mrb[0].mxu0
      %1214 = vmatprep.mubr.bf16.mxu0 0
      %1215 = vmatmul.mubr.bf16.gmra.mrb[0].mxu0 %v924
      %v1216 = vpop.f32.mrb[0].mxu0
      %v1217 = vadd.f32 0.0, %v1216
      %v1218 = vpop.f32.mrb[0].mxu0
      %v1219 = vpop.f32.mrb[0].mxu0
      %v1220 = vadd.f32 0.0, %v1219
      %v1221 = vpop.f32.mrb[0].mxu0
      %1222 = vmatprep.mubr.bf16.mxu0 0
      %1223 = vmatmul.mubr.bf16.gmra.mrb[0].mxu0 %v926
      %v1224 = vpop.f32.mrb[0].mxu0
      %v1225 = vadd.f32 0.0, %v1224
      %v1226 = vpop.f32.mrb[0].mxu0
      %v1227 = vpop.f32.mrb[0].mxu0
      %v1228 = vadd.f32 0.0, %v1227
      %v1229 = vpop.f32.mrb[0].mxu0
      %1230 = vmatprep.mubr.bf16.mxu0 0
      %1231 = vmatmul.mubr.bf16.gmra.mrb[0].mxu0 %v928
      %v1232 = vpop.f32.mrb[0].mxu0
      %v1233 = vadd.f32 0.0, %v1232
      %v1234 = vpop.f32.mrb[0].mxu0
      %v1235 = vpop.f32.mrb[0].mxu0
      %v1236 = vadd.f32 0.0, %v1235
      %v1237 = vpop.f32.mrb[0].mxu0
      %1238 = vmatprep.mubr.bf16.mxu0 0
      %1239 = vmatmul.mubr.bf16.gmra.mrb[0].mxu0 %v930
      %v1240 = vpop.f32.mrb[0].mxu0
      %v1241 = vadd.f32 0.0, %v1240
      %v1242 = vpop.f32.mrb[0].mxu0
      %v1243 = vpop.f32.mrb[0].mxu0
      %v1244 = vadd.f32 0.0, %v1243
      %v1245 = vpop.f32.mrb[0].mxu0
      %1246 = vmatprep.mubr.bf16.mxu0 0
      %1247 = vmatmul.mubr.bf16.gmra.mrb[0].mxu0 %v932
      %v1248 = vpop.f32.mrb[0].mxu0
      %v1249 = vadd.f32 0.0, %v1248
      %v1250 = vpop.f32.mrb[0].mxu0
      %v1251 = vpop.f32.mrb[0].mxu0
      %v1252 = vadd.f32 0.0, %v1251
      %v1253 = vpop.f32.mrb[0].mxu0
      %1254 = vmatprep.mubr.bf16.mxu0 0
      %1255 = vmatmul.mubr.bf16.gmra.mrb[0].mxu0 %v934
      %v1256 = vpop.f32.mrb[0].mxu0
      %v1257 = vadd.f32 0.0, %v1256
      %v1258 = vpop.f32.mrb[0].mxu0
      %v1259 = vpop.f32.mrb[0].mxu0
      %v1260 = vadd.f32 0.0, %v1259
      %v1261 = vpop.f32.mrb[0].mxu0
      %1262 = vmatprep.mubr.bf16.mxu0 0
      %1263 = vmatmul.mubr.bf16.gmra.mrb[0].mxu0 %v936
      %v1264 = vpop.f32.mrb[0].mxu0
      %v1265 = vadd.f32 0.0, %v1264
      %v1266 = vpop.f32.mrb[0].mxu0
      %v1267 = vpop.f32.mrb[0].mxu0
      %v1268 = vadd.f32 0.0, %v1267
      %v1269 = vpop.f32.mrb[0].mxu0
      %1270 = vmatprep.mubr.bf16.mxu0 0
      %1271 = vmatmul.mubr.bf16.gmra.mrb[0].mxu0 %v938
      %v1272 = vpop.f32.mrb[0].mxu0
      %v1273 = vadd.f32 0.0, %v1272
      %v1274 = vpop.f32.mrb[0].mxu0
      %v1275 = vpop.f32.mrb[0].mxu0
      %v1276 = vadd.f32 0.0, %v1275
      %v1277 = vpop.f32.mrb[0].mxu0
      %1278 = vmatprep.mubr.bf16.mxu0 0
      %1279 = vmatmul.mubr.bf16.gmra.mrb[0].mxu0 %v940
      %v1280 = vpop.f32.mrb[0].mxu0
      %v1281 = vadd.f32 0.0, %v1280
      %v1282 = vpop.f32.mrb[0].mxu0
      %v1283 = vpop.f32.mrb[0].mxu0
      %v1284 = vadd.f32 0.0, %v1283
      %v1285 = vpop.f32.mrb[0].mxu0
      %1286 = vmatprep.mubr.bf16.mxu0 0
      %1287 = vmatmul.mubr.bf16.gmra.mrb[0].mxu0 %v942
      %v1288 = vpop.f32.mrb[0].mxu0
      %v1289 = vadd.f32 0.0, %v1288
      %v1290 = vpop.f32.mrb[0].mxu0
      %v1291 = vpop.f32.mrb[0].mxu0
      %v1292 = vadd.f32 0.0, %v1291
      %v1293 = vpop.f32.mrb[0].mxu0
      %1294 = vmatprep.mubr.bf16.mxu0 0
      %1295 = vmatmul.mubr.bf16.gmra.mrb[0].mxu0 %v944
      %v1296 = vpop.f32.mrb[0].mxu0
      %v1297 = vadd.f32 0.0, %v1296
      %v1298 = vpop.f32.mrb[0].mxu0
      %v1299 = vpop.f32.mrb[0].mxu0
      %v1300 = vadd.f32 0.0, %v1299
      %v1301 = vpop.f32.mrb[0].mxu0
      %1302 = vmatprep.mubr.bf16.mxu0 0
      %1303 = vmatmul.mubr.bf16.gmra.mrb[0].mxu0 %v946
      %v1304 = vpop.f32.mrb[0].mxu0
      %v1305 = vadd.f32 0.0, %v1304
      %v1306 = vpop.f32.mrb[0].mxu0
      %v1307 = vpop.f32.mrb[0].mxu0
      %v1308 = vadd.f32 0.0, %v1307
      %v1309 = vpop.f32.mrb[0].mxu0
      %1310 = vmatprep.mubr.bf16.mxu0 0
      %1311 = vmatmul.mubr.bf16.gmra.mrb[0].mxu0 %v1153
      %v1312 = vpop.f32.mrb[0].mxu0
      %v1313 = vadd.f32 0.0, %v1312
      %v1314 = vpop.f32.mrb[0].mxu0
      %v1315 = vpop.f32.mrb[0].mxu0
      %v1316 = vadd.f32 0.0, %v1315
      %v1317 = vpop.f32.mrb[0].mxu0
      %1318 = vdwg.mxu0
      %v1319 = vld [vmem:[#allocation2] sm:$0xff]
      %v1320 = vld [vmem:[#allocation2 + $0x8] sm:$0xff]
      %v1321 = vld [vmem:[#allocation2 + $0x10] sm:$0xff]
      %v1322 = vld [vmem:[#allocation2 + $0x18] sm:$0xff]
      %v1323 = vld [vmem:[#allocation2 + $0x20] sm:$0xff]
      %v1324 = vld [vmem:[#allocation2 + $0x28] sm:$0xff]
      %v1325 = vld [vmem:[#allocation2 + $0x30] sm:$0xff]
      %v1326 = vld [vmem:[#allocation2 + $0x38] sm:$0xff]
      %v1327 = vld [vmem:[#allocation2 + $0x40] sm:$0xff]
      %v1328 = vld [vmem:[#allocation2 + $0x48] sm:$0xff]
      %v1329 = vld [vmem:[#allocation2 + $0x50] sm:$0xff]
      %v1330 = vld [vmem:[#allocation2 + $0x58] sm:$0xff]
      %v1331 = vld [vmem:[#allocation2 + $0x60] sm:$0xff]
      %v1332 = vld [vmem:[#allocation2 + $0x68] sm:$0xff]
      %v1333 = vld [vmem:[#allocation2 + $0x70] sm:$0xff]
      %v1334 = vld [vmem:[#allocation2 + $0x78] sm:$0xff]
      %v1335 = vld [vmem:[#allocation2 + $0x80] sm:$0xff]
      %v1336 = vld [vmem:[#allocation2 + $0x88] sm:$0xff]
      %v1337 = vld [vmem:[#allocation2 + $0x90] sm:$0xff]
      %v1338 = vld [vmem:[#allocation2 + $0x98] sm:$0xff]
      %v1339 = vld [vmem:[#allocation2 + $0xa0] sm:$0xff]
      %v1340 = vld [vmem:[#allocation2 + $0xa8] sm:$0xff]
      %v1341 = vld [vmem:[#allocation2 + $0xb0] sm:$0xff]
      %v1342 = vld [vmem:[#allocation2 + $0xb8] sm:$0xff]
      %v1343 = vld [vmem:[#allocation2 + $0xc0] sm:$0xff]
      %v1344 = vld [vmem:[#allocation2 + $0xc8] sm:$0xff]
      %v1345 = vld [vmem:[#allocation2 + $0xd0] sm:$0xff]
      %v1346 = vld [vmem:[#allocation2 + $0xd8] sm:$0xff]
      %v1347 = vld [vmem:[#allocation2 + $0xe0] sm:$0xff]
      %v1348 = vld [vmem:[#allocation2 + $0xe8] sm:$0xff]
      %v1349 = vld [vmem:[#allocation2 + $0xf0] sm:$0xff]
      %v1350 = vld [vmem:[#allocation2 + $0xf8] sm:$0xff]
      %v1351 = vadd.f32 %v1319, %v1193
      %v1352 = vadd.f32 %v1320, %v1196
      %v1353 = vadd.f32 %v1321, %v1201
      %v1354 = vadd.f32 %v1322, %v1204
      %v1355 = vadd.f32 %v1323, %v1209
      %v1356 = vadd.f32 %v1324, %v1212
      %v1357 = vadd.f32 %v1325, %v1217
      %v1358 = vadd.f32 %v1326, %v1220
      %v1359 = vadd.f32 %v1327, %v1225
      %v1360 = vadd.f32 %v1328, %v1228
      %v1361 = vadd.f32 %v1329, %v1233
      %v1362 = vadd.f32 %v1330, %v1236
      %v1363 = vadd.f32 %v1331, %v1241
      %v1364 = vadd.f32 %v1332, %v1244
      %v1365 = vadd.f32 %v1333, %v1249
      %v1366 = vadd.f32 %v1334, %v1252
      %v1367 = vadd.f32 %v1335, %v1257
      %v1368 = vadd.f32 %v1336, %v1260
      %v1369 = vadd.f32 %v1337, %v1265
      %v1370 = vadd.f32 %v1338, %v1268
      %v1371 = vadd.f32 %v1339, %v1273
      %v1372 = vadd.f32 %v1340, %v1276
      %v1373 = vadd.f32 %v1341, %v1281
      %v1374 = vadd.f32 %v1342, %v1284
      %v1375 = vadd.f32 %v1343, %v1289
      %v1376 = vadd.f32 %v1344, %v1292
      %v1377 = vadd.f32 %v1345, %v1297
      %v1378 = vadd.f32 %v1346, %v1300
      %v1379 = vadd.f32 %v1347, %v1305
      %v1380 = vadd.f32 %v1348, %v1308
      %v1381 = vadd.f32 %v1349, %v1313
      %v1382 = vadd.f32 %v1350, %v1316
      %1383 = vst [vmem:[#allocation2] sm:$0xff] %v1351
      %1384 = vst [vmem:[#allocation2 + $0x8] sm:$0xff] %v1352
      %1385 = vst [vmem:[#allocation2 + $0x10] sm:$0xff] %v1353
      %1386 = vst [vmem:[#allocation2 + $0x18] sm:$0xff] %v1354
      %1387 = vst [vmem:[#allocation2 + $0x20] sm:$0xff] %v1355
      %1388 = vst [vmem:[#allocation2 + $0x28] sm:$0xff] %v1356
      %1389 = vst [vmem:[#allocation2 + $0x30] sm:$0xff] %v1357
      %1390 = vst [vmem:[#allocation2 + $0x38] sm:$0xff] %v1358
      %1391 = vst [vmem:[#allocation2 + $0x40] sm:$0xff] %v1359
      %1392 = vst [vmem:[#allocation2 + $0x48] sm:$0xff] %v1360
      %1393 = vst [vmem:[#allocation2 + $0x50] sm:$0xff] %v1361
      %1394 = vst [vmem:[#allocation2 + $0x58] sm:$0xff] %v1362
      %1395 = vst [vmem:[#allocation2 + $0x60] sm:$0xff] %v1363
      %1396 = vst [vmem:[#allocation2 + $0x68] sm:$0xff] %v1364
      %1397 = vst [vmem:[#allocation2 + $0x70] sm:$0xff] %v1365
      %1398 = vst [vmem:[#allocation2 + $0x78] sm:$0xff] %v1366
      %1399 = vst [vmem:[#allocation2 + $0x80] sm:$0xff] %v1367
      %1400 = vst [vmem:[#allocation2 + $0x88] sm:$0xff] %v1368
      %1401 = vst [vmem:[#allocation2 + $0x90] sm:$0xff] %v1369
      %1402 = vst [vmem:[#allocation2 + $0x98] sm:$0xff] %v1370
      %1403 = vst [vmem:[#allocation2 + $0xa0] sm:$0xff] %v1371
      %1404 = vst [vmem:[#allocation2 + $0xa8] sm:$0xff] %v1372
      %1405 = vst [vmem:[#allocation2 + $0xb0] sm:$0xff] %v1373
      %1406 = vst [vmem:[#allocation2 + $0xb8] sm:$0xff] %v1374
      %1407 = vst [vmem:[#allocation2 + $0xc0] sm:$0xff] %v1375
      %1408 = vst [vmem:[#allocation2 + $0xc8] sm:$0xff] %v1376
      %1409 = vst [vmem:[#allocation2 + $0xd0] sm:$0xff] %v1377
      %1410 = vst [vmem:[#allocation2 + $0xd8] sm:$0xff] %v1378
      %1411 = vst [vmem:[#allocation2 + $0xe0] sm:$0xff] %v1379
      %1412 = vst [vmem:[#allocation2 + $0xe8] sm:$0xff] %v1380
      %1413 = vst [vmem:[#allocation2 + $0xf0] sm:$0xff] %v1381
      %1414 = vst [vmem:[#allocation2 + $0xf8] sm:$0xff] %v1382
      %s1415 = scalar_lea.vmem %s1, 16
      %v1416 = vld [vmem:[%s1415] sm:$0xf]
      %v1417 = vld [vmem:[%s1415 + $0x4] sm:$0x3]
      %v1420 = vunpack.c.l.b16 %v1416
      %v1421 = vunpack.c.l.b16 %v1417
      %v1422 = vpack.c.b16 %v1421, %v1420
      %v1423 = vsel %vm915, %v907, 0
      %v1426 = vsel %vm948, %v1422, 0
      %1428 = vmatprep.subr.bf16.mxu0 0
      %1429 = vmatpush1.bf16.msra.mxu0 %v1426
      %1430 = vmatprep.subr.bf16.mxu0 0
      %1431 = vmatpush1.bf16.msra.mxu0 0
      %1432 = vmatprep.subr.bf16.mxu0 0
      %1433 = vmatpush1.bf16.msra.mxu0 0
      %1434 = vmatprep.subr.bf16.mxu0 0
      %1435 = vmatpush1.bf16.msra.mxu0 0
      %1436 = vmatprep.subr.bf16.mxu0 0
      %1437 = vmatpush1.bf16.msra.mxu0 0
      %1438 = vmatprep.subr.bf16.mxu0 0
      %1439 = vmatpush1.bf16.msra.mxu0 0
      %1440 = vmatprep.subr.bf16.mxu0 0
      %1441 = vmatpush1.bf16.msra.mxu0 0
      %1442 = vmatprep.subr.bf16.mxu0 0
      %1443 = vmatpush1.bf16.msra.mxu0 0
      %1444 = vmatprep.subr.bf16.mxu0 0
      %1445 = vmatpush1.bf16.msra.mxu0 0
      %1446 = vmatprep.subr.bf16.mxu0 0
      %1447 = vmatpush1.bf16.msra.mxu0 0
      %1448 = vmatprep.subr.bf16.mxu0 0
      %1449 = vmatpush1.bf16.msra.mxu0 0
      %1450 = vmatprep.subr.bf16.mxu0 0
      %1451 = vmatpush1.bf16.msra.mxu0 0
      %1452 = vmatprep.subr.bf16.mxu0 0
      %1453 = vmatpush1.bf16.msra.mxu0 0
      %1454 = vmatprep.subr.bf16.mxu0 0
      %1455 = vmatpush1.bf16.msra.mxu0 0
      %1456 = vmatprep.subr.bf16.mxu0 0
      %1457 = vmatpush1.bf16.msra.mxu0 0
      %1458 = vmatprep.subr.bf16.mxu0 0
      %1459 = vmatpush1.bf16.msra.mxu0 0
      %1460 = vmatprep.mubr.bf16.mxu0 0
      %1461 = vmatmul.mubr.bf16.gmra.mrb[0].mxu0 %v920
      %v1462 = vpop.f32.mrb[0].mxu0
      %v1463 = vadd.f32 0.0, %v1462
      %v1464 = vpop.f32.mrb[0].mxu0
      %v1465 = vpop.f32.mrb[0].mxu0
      %v1466 = vadd.f32 0.0, %v1465
      %v1467 = vpop.f32.mrb[0].mxu0
      %1468 = vmatprep.mubr.bf16.mxu0 0
      %1469 = vmatmul.mubr.bf16.gmra.mrb[0].mxu0 %v922
      %v1470 = vpop.f32.mrb[0].mxu0
      %v1471 = vadd.f32 0.0, %v1470
      %v1472 = vpop.f32.mrb[0].mxu0
      %v1473 = vpop.f32.mrb[0].mxu0
      %v1474 = vadd.f32 0.0, %v1473
      %v1475 = vpop.f32.mrb[0].mxu0
      %1476 = vmatprep.mubr.bf16.mxu0 0
      %1477 = vmatmul.mubr.bf16.gmra.mrb[0].mxu0 %v924
      %v1478 = vpop.f32.mrb[0].mxu0
      %v1479 = vadd.f32 0.0, %v1478
      %v1480 = vpop.f32.mrb[0].mxu0
      %v1481 = vpop.f32.mrb[0].mxu0
      %v1482 = vadd.f32 0.0, %v1481
      %v1483 = vpop.f32.mrb[0].mxu0
      %1484 = vmatprep.mubr.bf16.mxu0 0
      %1485 = vmatmul.mubr.bf16.gmra.mrb[0].mxu0 %v926
      %v1486 = vpop.f32.mrb[0].mxu0
      %v1487 = vadd.f32 0.0, %v1486
      %v1488 = vpop.f32.mrb[0].mxu0
      %v1489 = vpop.f32.mrb[0].mxu0
      %v1490 = vadd.f32 0.0, %v1489
      %v1491 = vpop.f32.mrb[0].mxu0
      %1492 = vmatprep.mubr.bf16.mxu0 0
      %1493 = vmatmul.mubr.bf16.gmra.mrb[0].mxu0 %v928
      %v1494 = vpop.f32.mrb[0].mxu0
      %v1495 = vadd.f32 0.0, %v1494
      %v1496 = vpop.f32.mrb[0].mxu0
      %v1497 = vpop.f32.mrb[0].mxu0
      %v1498 = vadd.f32 0.0, %v1497
      %v1499 = vpop.f32.mrb[0].mxu0
      %1500 = vmatprep.mubr.bf16.mxu0 0
      %1501 = vmatmul.mubr.bf16.gmra.mrb[0].mxu0 %v930
      %v1502 = vpop.f32.mrb[0].mxu0
      %v1503 = vadd.f32 0.0, %v1502
      %v1504 = vpop.f32.mrb[0].mxu0
      %v1505 = vpop.f32.mrb[0].mxu0
      %v1506 = vadd.f32 0.0, %v1505
      %v1507 = vpop.f32.mrb[0].mxu0
      %1508 = vmatprep.mubr.bf16.mxu0 0
      %1509 = vmatmul.mubr.bf16.gmra.mrb[0].mxu0 %v932
      %v1510 = vpop.f32.mrb[0].mxu0
      %v1511 = vadd.f32 0.0, %v1510
      %v1512 = vpop.f32.mrb[0].mxu0
      %v1513 = vpop.f32.mrb[0].mxu0
      %v1514 = vadd.f32 0.0, %v1513
      %v1515 = vpop.f32.mrb[0].mxu0
      %1516 = vmatprep.mubr.bf16.mxu0 0
      %1517 = vmatmul.mubr.bf16.gmra.mrb[0].mxu0 %v934
      %v1518 = vpop.f32.mrb[0].mxu0
      %v1519 = vadd.f32 0.0, %v1518
      %v1520 = vpop.f32.mrb[0].mxu0
      %v1521 = vpop.f32.mrb[0].mxu0
      %v1522 = vadd.f32 0.0, %v1521
      %v1523 = vpop.f32.mrb[0].mxu0
      %1524 = vmatprep.mubr.bf16.mxu0 0
      %1525 = vmatmul.mubr.bf16.gmra.mrb[0].mxu0 %v936
      %v1526 = vpop.f32.mrb[0].mxu0
      %v1527 = vadd.f32 0.0, %v1526
      %v1528 = vpop.f32.mrb[0].mxu0
      %v1529 = vpop.f32.mrb[0].mxu0
      %v1530 = vadd.f32 0.0, %v1529
      %v1531 = vpop.f32.mrb[0].mxu0
      %1532 = vmatprep.mubr.bf16.mxu0 0
      %1533 = vmatmul.mubr.bf16.gmra.mrb[0].mxu0 %v938
      %v1534 = vpop.f32.mrb[0].mxu0
      %v1535 = vadd.f32 0.0, %v1534
      %v1536 = vpop.f32.mrb[0].mxu0
      %v1537 = vpop.f32.mrb[0].mxu0
      %v1538 = vadd.f32 0.0, %v1537
      %v1539 = vpop.f32.mrb[0].mxu0
      %1540 = vmatprep.mubr.bf16.mxu0 0
      %1541 = vmatmul.mubr.bf16.gmra.mrb[0].mxu0 %v940
      %v1542 = vpop.f32.mrb[0].mxu0
      %v1543 = vadd.f32 0.0, %v1542
      %v1544 = vpop.f32.mrb[0].mxu0
      %v1545 = vpop.f32.mrb[0].mxu0
      %v1546 = vadd.f32 0.0, %v1545
      %v1547 = vpop.f32.mrb[0].mxu0
      %1548 = vmatprep.mubr.bf16.mxu0 0
      %1549 = vmatmul.mubr.bf16.gmra.mrb[0].mxu0 %v942
      %v1550 = vpop.f32.mrb[0].mxu0
      %v1551 = vadd.f32 0.0, %v1550
      %v1552 = vpop.f32.mrb[0].mxu0
      %v1553 = vpop.f32.mrb[0].mxu0
      %v1554 = vadd.f32 0.0, %v1553
      %v1555 = vpop.f32.mrb[0].mxu0
      %1556 = vmatprep.mubr.bf16.mxu0 0
      %1557 = vmatmul.mubr.bf16.gmra.mrb[0].mxu0 %v944
      %v1558 = vpop.f32.mrb[0].mxu0
      %v1559 = vadd.f32 0.0, %v1558
      %v1560 = vpop.f32.mrb[0].mxu0
      %v1561 = vpop.f32.mrb[0].mxu0
      %v1562 = vadd.f32 0.0, %v1561
      %v1563 = vpop.f32.mrb[0].mxu0
      %1564 = vmatprep.mubr.bf16.mxu0 0
      %1565 = vmatmul.mubr.bf16.gmra.mrb[0].mxu0 %v946
      %v1566 = vpop.f32.mrb[0].mxu0
      %v1567 = vadd.f32 0.0, %v1566
      %v1568 = vpop.f32.mrb[0].mxu0
      %v1569 = vpop.f32.mrb[0].mxu0
      %v1570 = vadd.f32 0.0, %v1569
      %v1571 = vpop.f32.mrb[0].mxu0
      %1572 = vmatprep.mubr.bf16.mxu0 0
      %1573 = vmatmul.mubr.bf16.gmra.mrb[0].mxu0 %v1153
      %v1574 = vpop.f32.mrb[0].mxu0
      %v1575 = vadd.f32 0.0, %v1574
      %v1576 = vpop.f32.mrb[0].mxu0
      %v1577 = vpop.f32.mrb[0].mxu0
      %v1578 = vadd.f32 0.0, %v1577
      %v1579 = vpop.f32.mrb[0].mxu0
      %1580 = vmatprep.mubr.bf16.mxu0 0
      %1581 = vmatmul.mubr.bf16.gmra.mrb[0].mxu0 %v1423
      %v1582 = vpop.f32.mrb[0].mxu0
      %v1583 = vadd.f32 0.0, %v1582
      %v1584 = vpop.f32.mrb[0].mxu0
      %v1585 = vpop.f32.mrb[0].mxu0
      %v1586 = vadd.f32 0.0, %v1585
      %v1587 = vpop.f32.mrb[0].mxu0
      %1588 = vdwg.mxu0
      %v1589 = vld [vmem:[#allocation2] sm:$0xff]
      %v1590 = vld [vmem:[#allocation2 + $0x8] sm:$0xff]
      %v1591 = vld [vmem:[#allocation2 + $0x10] sm:$0xff]
      %v1592 = vld [vmem:[#allocation2 + $0x18] sm:$0xff]
      %v1593 = vld [vmem:[#allocation2 + $0x20] sm:$0xff]
      %v1594 = vld [vmem:[#allocation2 + $0x28] sm:$0xff]
      %v1595 = vld [vmem:[#allocation2 + $0x30] sm:$0xff]
      %v1596 = vld [vmem:[#allocation2 + $0x38] sm:$0xff]
      %v1597 = vld [vmem:[#allocation2 + $0x40] sm:$0xff]
      %v1598 = vld [vmem:[#allocation2 + $0x48] sm:$0xff]
      %v1599 = vld [vmem:[#allocation2 + $0x50] sm:$0xff]
      %v1600 = vld [vmem:[#allocation2 + $0x58] sm:$0xff]
      %v1601 = vld [vmem:[#allocation2 + $0x60] sm:$0xff]
      %v1602 = vld [vmem:[#allocation2 + $0x68] sm:$0xff]
      %v1603 = vld [vmem:[#allocation2 + $0x70] sm:$0xff]
      %v1604 = vld [vmem:[#allocation2 + $0x78] sm:$0xff]
      %v1605 = vld [vmem:[#allocation2 + $0x80] sm:$0xff]
      %v1606 = vld [vmem:[#allocation2 + $0x88] sm:$0xff]
      %v1607 = vld [vmem:[#allocation2 + $0x90] sm:$0xff]
      %v1608 = vld [vmem:[#allocation2 + $0x98] sm:$0xff]
      %v1609 = vld [vmem:[#allocation2 + $0xa0] sm:$0xff]
      %v1610 = vld [vmem:[#allocation2 + $0xa8] sm:$0xff]
      %v1611 = vld [vmem:[#allocation2 + $0xb0] sm:$0xff]
      %v1612 = vld [vmem:[#allocation2 + $0xb8] sm:$0xff]
      %v1613 = vld [vmem:[#allocation2 + $0xc0] sm:$0xff]
      %v1614 = vld [vmem:[#allocation2 + $0xc8] sm:$0xff]
      %v1615 = vld [vmem:[#allocation2 + $0xd0] sm:$0xff]
      %v1616 = vld [vmem:[#allocation2 + $0xd8] sm:$0xff]
      %v1617 = vld [vmem:[#allocation2 + $0xe0] sm:$0xff]
      %v1618 = vld [vmem:[#allocation2 + $0xe8] sm:$0xff]
      %v1619 = vld [vmem:[#allocation2 + $0xf0] sm:$0xff]
      %v1620 = vld [vmem:[#allocation2 + $0xf8] sm:$0xff]
      %v1621 = vadd.f32 %v1589, %v1463
      %v1622 = vadd.f32 %v1590, %v1466
      %v1623 = vadd.f32 %v1591, %v1471
      %v1624 = vadd.f32 %v1592, %v1474
      %v1625 = vadd.f32 %v1593, %v1479
      %v1626 = vadd.f32 %v1594, %v1482
      %v1627 = vadd.f32 %v1595, %v1487
      %v1628 = vadd.f32 %v1596, %v1490
      %v1629 = vadd.f32 %v1597, %v1495
      %v1630 = vadd.f32 %v1598, %v1498
      %v1631 = vadd.f32 %v1599, %v1503
      %v1632 = vadd.f32 %v1600, %v1506
      %v1633 = vadd.f32 %v1601, %v1511
      %v1634 = vadd.f32 %v1602, %v1514
      %v1635 = vadd.f32 %v1603, %v1519
      %v1636 = vadd.f32 %v1604, %v1522
      %v1637 = vadd.f32 %v1605, %v1527
      %v1638 = vadd.f32 %v1606, %v1530
      %v1639 = vadd.f32 %v1607, %v1535
      %v1640 = vadd.f32 %v1608, %v1538
      %v1641 = vadd.f32 %v1609, %v1543
      %v1642 = vadd.f32 %v1610, %v1546
      %v1643 = vadd.f32 %v1611, %v1551
      %v1644 = vadd.f32 %v1612, %v1554
      %v1645 = vadd.f32 %v1613, %v1559
      %v1646 = vadd.f32 %v1614, %v1562
      %v1647 = vadd.f32 %v1615, %v1567
      %v1648 = vadd.f32 %v1616, %v1570
      %v1649 = vadd.f32 %v1617, %v1575
      %v1650 = vadd.f32 %v1618, %v1578
      %v1651 = vadd.f32 %v1619, %v1583
      %v1652 = vadd.f32 %v1620, %v1586
      %1653 = vst [vmem:[#allocation2] sm:$0xff] %v1621
      %1654 = vst [vmem:[#allocation2 + $0x8] sm:$0xff] %v1622
      %1655 = vst [vmem:[#allocation2 + $0x10] sm:$0xff] %v1623
      %1656 = vst [vmem:[#allocation2 + $0x18] sm:$0xff] %v1624
      %1657 = vst [vmem:[#allocation2 + $0x20] sm:$0xff] %v1625
      %1658 = vst [vmem:[#allocation2 + $0x28] sm:$0xff] %v1626
      %1659 = vst [vmem:[#allocation2 + $0x30] sm:$0xff] %v1627
      %1660 = vst [vmem:[#allocation2 + $0x38] sm:$0xff] %v1628
      %1661 = vst [vmem:[#allocation2 + $0x40] sm:$0xff] %v1629
      %1662 = vst [vmem:[#allocation2 + $0x48] sm:$0xff] %v1630
      %1663 = vst [vmem:[#allocation2 + $0x50] sm:$0xff] %v1631
      %1664 = vst [vmem:[#allocation2 + $0x58] sm:$0xff] %v1632
      %1665 = vst [vmem:[#allocation2 + $0x60] sm:$0xff] %v1633
      %1666 = vst [vmem:[#allocation2 + $0x68] sm:$0xff] %v1634
      %1667 = vst [vmem:[#allocation2 + $0x70] sm:$0xff] %v1635
      %1668 = vst [vmem:[#allocation2 + $0x78] sm:$0xff] %v1636
      %1669 = vst [vmem:[#allocation2 + $0x80] sm:$0xff] %v1637
      %1670 = vst [vmem:[#allocation2 + $0x88] sm:$0xff] %v1638
      %1671 = vst [vmem:[#allocation2 + $0x90] sm:$0xff] %v1639
      %1672 = vst [vmem:[#allocation2 + $0x98] sm:$0xff] %v1640
      %1673 = vst [vmem:[#allocation2 + $0xa0] sm:$0xff] %v1641
      %1674 = vst [vmem:[#allocation2 + $0xa8] sm:$0xff] %v1642
      %1675 = vst [vmem:[#allocation2 + $0xb0] sm:$0xff] %v1643
      %1676 = vst [vmem:[#allocation2 + $0xb8] sm:$0xff] %v1644
      %1677 = vst [vmem:[#allocation2 + $0xc0] sm:$0xff] %v1645
      %1678 = vst [vmem:[#allocation2 + $0xc8] sm:$0xff] %v1646
      %1679 = vst [vmem:[#allocation2 + $0xd0] sm:$0xff] %v1647
      %1680 = vst [vmem:[#allocation2 + $0xd8] sm:$0xff] %v1648
      %1681 = vst [vmem:[#allocation2 + $0xe0] sm:$0xff] %v1649
      %1682 = vst [vmem:[#allocation2 + $0xe8] sm:$0xff] %v1650
      %1683 = vst [vmem:[#allocation2 + $0xf0] sm:$0xff] %v1651
      %1684 = vst [vmem:[#allocation2 + $0xf8] sm:$0xff] %v1652
      %v1685 = vld [vmem:[#allocation2] sm:$0xff]
      %v1686 = vld [vmem:[#allocation2 + $0x8] sm:$0xff]
      %v1687 = vld [vmem:[#allocation2 + $0x10] sm:$0xff]
      %v1688 = vld [vmem:[#allocation2 + $0x18] sm:$0xff]
      %v1689 = vld [vmem:[#allocation2 + $0x20] sm:$0xff]
      %v1690 = vld [vmem:[#allocation2 + $0x28] sm:$0xff]
      %v1691 = vld [vmem:[#allocation2 + $0x30] sm:$0xff]
      %v1692 = vld [vmem:[#allocation2 + $0x38] sm:$0xff]
      %v1693 = vld [vmem:[#allocation2 + $0x40] sm:$0xff]
      %v1694 = vld [vmem:[#allocation2 + $0x48] sm:$0xff]
      %v1695 = vld [vmem:[#allocation2 + $0x50] sm:$0xff]
      %v1696 = vld [vmem:[#allocation2 + $0x58] sm:$0xff]
      %v1697 = vld [vmem:[#allocation2 + $0x60] sm:$0xff]
      %v1698 = vld [vmem:[#allocation2 + $0x68] sm:$0xff]
      %v1699 = vld [vmem:[#allocation2 + $0x70] sm:$0xff]
      %v1700 = vld [vmem:[#allocation2 + $0x78] sm:$0xff]
      %v1701 = vld [vmem:[#allocation2 + $0x80] sm:$0xff]
      %v1702 = vld [vmem:[#allocation2 + $0x88] sm:$0xff]
      %v1703 = vld [vmem:[#allocation2 + $0x90] sm:$0xff]
      %v1704 = vld [vmem:[#allocation2 + $0x98] sm:$0xff]
      %v1705 = vld [vmem:[#allocation2 + $0xa0] sm:$0xff]
      %v1706 = vld [vmem:[#allocation2 + $0xa8] sm:$0xff]
      %v1707 = vld [vmem:[#allocation2 + $0xb0] sm:$0xff]
      %v1708 = vld [vmem:[#allocation2 + $0xb8] sm:$0xff]
      %v1709 = vld [vmem:[#allocation2 + $0xc0] sm:$0xff]
      %v1710 = vld [vmem:[#allocation2 + $0xc8] sm:$0xff]
      %v1711 = vld [vmem:[#allocation2 + $0xd0] sm:$0xff]
      %v1712 = vld [vmem:[#allocation2 + $0xd8] sm:$0xff]
      %v1713 = vld [vmem:[#allocation2 + $0xe0] sm:$0xff]
      %v1714 = vld [vmem:[#allocation2 + $0xe8] sm:$0xff]
      %v1715 = vld [vmem:[#allocation2 + $0xf0] sm:$0xff]
      %v1716 = vld [vmem:[#allocation2 + $0xf8] sm:$0xff]
      %v1717 = vpack.c.bf16 %v1686, %v1685
      %v1718 = vpack.c.bf16 %v1688, %v1687
      %v1719 = vpack.c.bf16 %v1690, %v1689
      %v1720 = vpack.c.bf16 %v1692, %v1691
      %v1721 = vpack.c.bf16 %v1694, %v1693
      %v1722 = vpack.c.bf16 %v1696, %v1695
      %v1723 = vpack.c.bf16 %v1698, %v1697
      %v1724 = vpack.c.bf16 %v1700, %v1699
      %v1725 = vpack.c.bf16 %v1702, %v1701
      %v1726 = vpack.c.bf16 %v1704, %v1703
      %v1727 = vpack.c.bf16 %v1706, %v1705
      %v1728 = vpack.c.bf16 %v1708, %v1707
      %v1729 = vpack.c.bf16 %v1710, %v1709
      %v1730 = vpack.c.bf16 %v1712, %v1711
      %v1731 = vpack.c.bf16 %v1714, %v1713
      %v1732 = vpack.c.bf16 %v1716, %v1715
      %v1749 = vunpack.c.l.b16 %v1717
      %v1750 = vunpack.c.h.b16 %v1717
      %v1751 = vunpack.c.l.b16 %v1718
      %v1752 = vunpack.c.h.b16 %v1718
      %v1753 = vunpack.c.l.b16 %v1719
      %v1754 = vunpack.c.h.b16 %v1719
      %v1755 = vunpack.c.l.b16 %v1720
      %v1756 = vunpack.c.h.b16 %v1720
      %v1757 = vunpack.c.l.b16 %v1721
      %v1758 = vunpack.c.h.b16 %v1721
      %v1759 = vunpack.c.l.b16 %v1722
      %v1760 = vunpack.c.h.b16 %v1722
      %v1761 = vunpack.c.l.b16 %v1723
      %v1762 = vunpack.c.h.b16 %v1723
      %v1763 = vunpack.c.l.b16 %v1724
      %v1764 = vunpack.c.h.b16 %v1724
      %v1765 = vunpack.c.l.b16 %v1725
      %v1766 = vunpack.c.h.b16 %v1725
      %v1767 = vunpack.c.l.b16 %v1726
      %v1768 = vunpack.c.h.b16 %v1726
      %v1769 = vunpack.c.l.b16 %v1727
      %v1770 = vunpack.c.h.b16 %v1727
      %v1771 = vunpack.c.l.b16 %v1728
      %v1772 = vunpack.c.h.b16 %v1728
      %v1773 = vunpack.c.l.b16 %v1729
      %v1774 = vunpack.c.h.b16 %v1729
      %v1775 = vunpack.c.l.b16 %v1730
      %v1776 = vunpack.c.h.b16 %v1730
      %v1777 = vunpack.c.l.b16 %v1731
      %v1778 = vunpack.c.h.b16 %v1731
      %v1779 = vunpack.c.l.b16 %v1732
      %v1780 = vunpack.c.h.b16 %v1732
      %v1781 = vpack.c.b16 %v1749, %v1749
      %v1782 = vpack.c.b16 %v1750, %v1750
      %v1783 = vpack.c.b16 %v1751, %v1751
      %v1784 = vpack.c.b16 %v1752, %v1752
      %v1785 = vpack.c.b16 %v1753, %v1753
      %v1786 = vpack.c.b16 %v1754, %v1754
      %v1787 = vpack.c.b16 %v1755, %v1755
      %v1788 = vpack.c.b16 %v1756, %v1756
      %v1789 = vpack.c.b16 %v1757, %v1757
      %v1790 = vpack.c.b16 %v1758, %v1758
      %v1791 = vpack.c.b16 %v1759, %v1759
      %v1792 = vpack.c.b16 %v1760, %v1760
      %v1793 = vpack.c.b16 %v1761, %v1761
      %v1794 = vpack.c.b16 %v1762, %v1762
      %v1795 = vpack.c.b16 %v1763, %v1763
      %v1796 = vpack.c.b16 %v1764, %v1764
      %v1797 = vpack.c.b16 %v1765, %v1765
      %v1798 = vpack.c.b16 %v1766, %v1766
      %v1799 = vpack.c.b16 %v1767, %v1767
      %v1800 = vpack.c.b16 %v1768, %v1768
      %v1801 = vpack.c.b16 %v1769, %v1769
      %v1802 = vpack.c.b16 %v1770, %v1770
      %v1803 = vpack.c.b16 %v1771, %v1771
      %v1804 = vpack.c.b16 %v1772, %v1772
      %v1805 = vpack.c.b16 %v1773, %v1773
      %v1806 = vpack.c.b16 %v1774, %v1774
      %v1807 = vpack.c.b16 %v1775, %v1775
      %v1808 = vpack.c.b16 %v1776, %v1776
      %v1809 = vpack.c.b16 %v1777, %v1777
      %v1810 = vpack.c.b16 %v1778, %v1778
      %v1811 = vpack.c.b16 %v1779, %v1779
      %v1812 = vpack.c.b16 %v1780, %v1780
      %1845 = vst [vmem:[%s206] sm:$0xf] %v1781
      %1846 = vst [vmem:[%s206 + $0x4] sm:$0xf] %v1782
      %1847 = vst [vmem:[%s206 + $0x8] sm:$0xf] %v1783
      %1848 = vst [vmem:[%s206 + $0xc] sm:$0xf] %v1784
      %1849 = vst [vmem:[%s206 + $0x10] sm:$0xf] %v1785
      %1850 = vst [vmem:[%s206 + $0x14] sm:$0xf] %v1786
      %1851 = vst [vmem:[%s206 + $0x18] sm:$0xf] %v1787
      %1852 = vst [vmem:[%s206 + $0x1c] sm:$0xf] %v1788
      %1853 = vst [vmem:[%s206 + $0x20] sm:$0xf] %v1789
      %1854 = vst [vmem:[%s206 + $0x24] sm:$0xf] %v1790
      %1855 = vst [vmem:[%s206 + $0x28] sm:$0xf] %v1791
      %1856 = vst [vmem:[%s206 + $0x2c] sm:$0xf] %v1792
      %1857 = vst [vmem:[%s206 + $0x30] sm:$0xf] %v1793
      %1858 = vst [vmem:[%s206 + $0x34] sm:$0xf] %v1794
      %1859 = vst [vmem:[%s206 + $0x38] sm:$0xf] %v1795
      %1860 = vst [vmem:[%s206 + $0x3c] sm:$0xf] %v1796
      %1861 = vst [vmem:[%s206 + $0x40] sm:$0xf] %v1797
      %1862 = vst [vmem:[%s206 + $0x44] sm:$0xf] %v1798
      %1863 = vst [vmem:[%s206 + $0x48] sm:$0xf] %v1799
      %1864 = vst [vmem:[%s206 + $0x4c] sm:$0xf] %v1800
      %1865 = vst [vmem:[%s206 + $0x50] sm:$0xf] %v1801
      %1866 = vst [vmem:[%s206 + $0x54] sm:$0xf] %v1802
      %1867 = vst [vmem:[%s206 + $0x58] sm:$0xf] %v1803
      %1868 = vst [vmem:[%s206 + $0x5c] sm:$0xf] %v1804
      %1869 = vst [vmem:[%s206 + $0x60] sm:$0xf] %v1805
      %1870 = vst [vmem:[%s206 + $0x64] sm:$0xf] %v1806
      %1871 = vst [vmem:[%s206 + $0x68] sm:$0xf] %v1807
      %1872 = vst [vmem:[%s206 + $0x6c] sm:$0xf] %v1808
      %1873 = vst [vmem:[%s206 + $0x70] sm:$0xf] %v1809
      %1874 = vst [vmem:[%s206 + $0x74] sm:$0xf] %v1810
      %1875 = vst [vmem:[%s206 + $0x78] sm:$0xf] %v1811
      %1876 = vst [vmem:[%s206 + $0x7c] sm:$0xf] %v1812
      %v1877 = vadd.f32 %v1685, %v1686
      %v1878 = vadd.f32 %v1877, %v1687
      %v1879 = vadd.f32 %v1878, %v1688
      %v1880 = vadd.f32 %v1879, %v1689
      %v1881 = vadd.f32 %v1880, %v1690
      %v1882 = vadd.f32 %v1881, %v1691
      %v1883 = vadd.f32 %v1882, %v1692
      %v1884 = vadd.f32 %v1883, %v1693
      %v1885 = vadd.f32 %v1884, %v1694
      %v1886 = vadd.f32 %v1885, %v1695
      %v1887 = vadd.f32 %v1886, %v1696
      %v1888 = vadd.f32 %v1887, %v1697
      %v1889 = vadd.f32 %v1888, %v1698
      %v1890 = vadd.f32 %v1889, %v1699
      %v1891 = vadd.f32 %v1890, %v1700
      %v1892 = vadd.f32 %v1891, %v1701
      %v1893 = vadd.f32 %v1892, %v1702
      %v1894 = vadd.f32 %v1893, %v1703
      %v1895 = vadd.f32 %v1894, %v1704
      %v1896 = vadd.f32 %v1895, %v1705
      %v1897 = vadd.f32 %v1896, %v1706
      %v1898 = vadd.f32 %v1897, %v1707
      %v1899 = vadd.f32 %v1898, %v1708
      %v1900 = vadd.f32 %v1899, %v1709
      %v1901 = vadd.f32 %v1900, %v1710
      %v1902 = vadd.f32 %v1901, %v1711
      %v1903 = vadd.f32 %v1902, %v1712
      %v1904 = vadd.f32 %v1903, %v1713
      %v1905 = vadd.f32 %v1904, %v1714
      %v1906 = vadd.f32 %v1905, %v1715
      %v1907 = vadd.f32 %v1906, %v1716
      %v1908 = vrot.slane %v1907, 4
      %v1909 = vadd.f32 %v1907, %v1908
      %v1910 = vrot.slane %v1909, 2
      %v1911 = vadd.f32 %v1909, %v1910
      %v1912 = vrot.slane %v1911, 1
      %v1913 = vadd.f32 %v1911, %v1912
      %v1914 = vmul.f32 %v1913, 0.00390625
      %v1915 = vsub.f32 %v1685, %v1914
      %v1916 = vsub.f32 %v1686, %v1914
      %v1917 = vsub.f32 %v1687, %v1914
      %v1918 = vsub.f32 %v1688, %v1914
      %v1919 = vsub.f32 %v1689, %v1914
      %v1920 = vsub.f32 %v1690, %v1914
      %v1921 = vsub.f32 %v1691, %v1914
      %v1922 = vsub.f32 %v1692, %v1914
      %v1923 = vsub.f32 %v1693, %v1914
      %v1924 = vsub.f32 %v1694, %v1914
      %v1925 = vsub.f32 %v1695, %v1914
      %v1926 = vsub.f32 %v1696, %v1914
      %v1927 = vsub.f32 %v1697, %v1914
      %v1928 = vsub.f32 %v1698, %v1914
      %v1929 = vsub.f32 %v1699, %v1914
      %v1930 = vsub.f32 %v1700, %v1914
      %v1931 = vsub.f32 %v1701, %v1914
      %v1932 = vsub.f32 %v1702, %v1914
      %v1933 = vsub.f32 %v1703, %v1914
      %v1934 = vsub.f32 %v1704, %v1914
      %v1935 = vsub.f32 %v1705, %v1914
      %v1936 = vsub.f32 %v1706, %v1914
      %v1937 = vsub.f32 %v1707, %v1914
      %v1938 = vsub.f32 %v1708, %v1914
      %v1939 = vsub.f32 %v1709, %v1914
      %v1940 = vsub.f32 %v1710, %v1914
      %v1941 = vsub.f32 %v1711, %v1914
      %v1942 = vsub.f32 %v1712, %v1914
      %v1943 = vsub.f32 %v1713, %v1914
      %v1944 = vsub.f32 %v1714, %v1914
      %v1945 = vsub.f32 %v1715, %v1914
      %v1946 = vsub.f32 %v1716, %v1914
      %1947 = vst [vmem:[%s214] sm:$0x1] %v1913
      %v1948 = vmul.f32 %v1915, %v1915
      %v1949 = vmul.f32 %v1916, %v1916
      %v1950 = vmul.f32 %v1917, %v1917
      %v1951 = vmul.f32 %v1918, %v1918
      %v1952 = vmul.f32 %v1919, %v1919
      %v1953 = vmul.f32 %v1920, %v1920
      %v1954 = vmul.f32 %v1921, %v1921
      %v1955 = vmul.f32 %v1922, %v1922
      %v1956 = vmul.f32 %v1923, %v1923
      %v1957 = vmul.f32 %v1924, %v1924
      %v1958 = vmul.f32 %v1925, %v1925
      %v1959 = vmul.f32 %v1926, %v1926
      %v1960 = vmul.f32 %v1927, %v1927
      %v1961 = vmul.f32 %v1928, %v1928
      %v1962 = vmul.f32 %v1929, %v1929
      %v1963 = vmul.f32 %v1930, %v1930
      %v1964 = vmul.f32 %v1931, %v1931
      %v1965 = vmul.f32 %v1932, %v1932
      %v1966 = vmul.f32 %v1933, %v1933
      %v1967 = vmul.f32 %v1934, %v1934
      %v1968 = vmul.f32 %v1935, %v1935
      %v1969 = vmul.f32 %v1936, %v1936
      %v1970 = vmul.f32 %v1937, %v1937
      %v1971 = vmul.f32 %v1938, %v1938
      %v1972 = vmul.f32 %v1939, %v1939
      %v1973 = vmul.f32 %v1940, %v1940
      %v1974 = vmul.f32 %v1941, %v1941
      %v1975 = vmul.f32 %v1942, %v1942
      %v1976 = vmul.f32 %v1943, %v1943
      %v1977 = vmul.f32 %v1944, %v1944
      %v1978 = vmul.f32 %v1945, %v1945
      %v1979 = vmul.f32 %v1946, %v1946
      %v1980 = vadd.f32 %v1948, %v1949
      %v1981 = vadd.f32 %v1980, %v1950
      %v1982 = vadd.f32 %v1981, %v1951
      %v1983 = vadd.f32 %v1982, %v1952
      %v1984 = vadd.f32 %v1983, %v1953
      %v1985 = vadd.f32 %v1984, %v1954
      %v1986 = vadd.f32 %v1985, %v1955
      %v1987 = vadd.f32 %v1986, %v1956
      %v1988 = vadd.f32 %v1987, %v1957
      %v1989 = vadd.f32 %v1988, %v1958
      %v1990 = vadd.f32 %v1989, %v1959
      %v1991 = vadd.f32 %v1990, %v1960
      %v1992 = vadd.f32 %v1991, %v1961
      %v1993 = vadd.f32 %v1992, %v1962
      %v1994 = vadd.f32 %v1993, %v1963
      %v1995 = vadd.f32 %v1994, %v1964
      %v1996 = vadd.f32 %v1995, %v1965
      %v1997 = vadd.f32 %v1996, %v1966
      %v1998 = vadd.f32 %v1997, %v1967
      %v1999 = vadd.f32 %v1998, %v1968
      %v2000 = vadd.f32 %v1999, %v1969
      %v2001 = vadd.f32 %v2000, %v1970
      %v2002 = vadd.f32 %v2001, %v1971
      %v2003 = vadd.f32 %v2002, %v1972
      %v2004 = vadd.f32 %v2003, %v1973
      %v2005 = vadd.f32 %v2004, %v1974
      %v2006 = vadd.f32 %v2005, %v1975
      %v2007 = vadd.f32 %v2006, %v1976
      %v2008 = vadd.f32 %v2007, %v1977
      %v2009 = vadd.f32 %v2008, %v1978
      %v2010 = vadd.f32 %v2009, %v1979
      %v2011 = vrot.slane %v2010, 4
      %v2012 = vadd.f32 %v2010, %v2011
      %v2013 = vrot.slane %v2012, 2
      %v2014 = vadd.f32 %v2012, %v2013
      %v2015 = vrot.slane %v2014, 1
      %v2016 = vadd.f32 %v2014, %v2015
      %2017 = vst [vmem:[%s214 + $0x1] sm:$0x1] %v2016
      %s2018 = smul.u32 16, %s20
      %p2019 = scmp.lt.s32.totalorder %s19, 1
      %s2020 = scalar_select %p2019, %s19, 1
      %p2021 = scmp.lt.s32.totalorder %s2018, 15
      %s2022 = scalar_select %p2021, %s2018, 15
      %s2023 = smul.addr %s2022, 2
      %s2024 = smul.addr %s2020, 32
      %s2025 = sadd.s32 %s2023, %s2024
      %s2026 = smul.addr %s2025, 4
      %s2027 = scalar_lea.vmem %s2, %s2026
      %p2028 = scmp.lt.s32.totalorder %s19, 1
      %s2029 = scalar_select %p2028, %s19, 1
      %p2030 = scmp.lt.s32.totalorder %s20, 0
      %s2031 = scalar_select %p2030, %s20, 0
      %s2032 = sadd.s32 %s2031, %s2029
      %s2033 = smul.addr %s2032, 2
      %s2034 = scalar_lea.vmem %s3, %s2033
      // Predicated region
      $region29: #{_unet_conv_block_impl.2} parent=27 // pred_check
        %p2035 = pneg %p94
      $region30: #{_unet_conv_block_impl.2} parent=27 // pred_check_branch
        %2037 = sbr.rel (%p2035) target = $region32
      $region31: #{_unet_conv_block_impl.2} parent=27 // pred_region
        %s2038 = smul.u32 16, %s20
      $region32: #{_unet_conv_block_impl.2} parent=27 // pred_fallthru
        _
      // Predicated region
      $region33: #{_unet_conv_block_impl.2} parent=27 // pred_check
        %p2039 = pneg %p122
      $region34: #{_unet_conv_block_impl.2} parent=27 // pred_check_branch
        %2041 = sbr.rel (%p2039) target = $region36
      $region35: #{_unet_conv_block_impl.2} parent=27 // pred_region
        _
      $region36: #{_unet_conv_block_impl.2} parent=27 // pred_fallthru
        _
    $region28: #{_unet_conv_block_impl.2} parent=5 // pred_fallthru
      _
    %p2042 = scmp.le.s32.totalorder 2, %s10
    // Predicated region
    $region37: #{_unet_conv_block_impl.2} parent=5 // pred_check
      %p2043 = pneg %p2042
    $region38: #{_unet_conv_block_impl.2} parent=5 // pred_check_branch
      %2045 = sbr.rel (%p2043) target = $region40
    $region39: #{_unet_conv_block_impl.2} parent=5 // pred_region
      %s2046 = ssub.s32 %s10, 2
      // Predicated region
      $region41: #{_unet_conv_block_impl.2} parent=39 // pred_check
        %p2047 = pneg %p100
      $region42: #{_unet_conv_block_impl.2} parent=39 // pred_check_branch
        %2049 = sbr.rel (%p2047) target = $region44
      $region43: #{_unet_conv_block_impl.2} parent=39 // pred_region
        %s2050 = smul.u32 16, %s22
        %p2051 = scmp.lt.s32.totalorder %s21, 1
        %s2052 = scalar_select %p2051, %s21, 1
        %p2053 = scmp.lt.s32.totalorder %s2050, 15
        %s2054 = scalar_select %p2053, %s2050, 15
        %s2055 = smul.addr %s2054, 2
        %s2056 = smul.addr %s2052, 32
        %s2057 = sadd.s32 %s2055, %s2056
        %s2058 = smul.addr %s2057, 4
        %s2059 = scalar_lea.vmem %s2, %s2058
      $region44: #{_unet_conv_block_impl.2} parent=39 // pred_fallthru
        _
      // Predicated region
      $region45: #{_unet_conv_block_impl.2} parent=39 // pred_check
        %p2060 = pneg %p128
      $region46: #{_unet_conv_block_impl.2} parent=39 // pred_check_branch
        %2062 = sbr.rel (%p2060) target = $region48
      $region47: #{_unet_conv_block_impl.2} parent=39 // pred_region
        %p2063 = scmp.lt.s32.totalorder %s21, 1
        %s2064 = scalar_select %p2063, %s21, 1
        %p2065 = scmp.lt.s32.totalorder %s22, 0
        %s2066 = scalar_select %p2065, %s22, 0
        %s2067 = sadd.s32 %s2066, %s2064
        %s2068 = smul.addr %s2067, 2
        %s2069 = scalar_lea.vmem %s3, %s2068
      $region48: #{_unet_conv_block_impl.2} parent=39 // pred_fallthru
        _
    $region40: #{_unet_conv_block_impl.2} parent=5 // pred_fallthru
      _
  $region6: #{_unet_conv_block_impl.2} parent=0 // loop_footer
    %s14 = sadd.s32 1, %s10
  $region7: #{_unet_conv_block_impl.2} parent=0 // loop_footer_branch
    %9 = sbr.rel target = $region3
  $region8: #{_unet_conv_block_impl.2} parent=0 // loop_exit
    _

</llo_original>
